<compile_context>
chip_gen: v7x
topology: tpu7x:2x2x1
jax: 0.10.0
libtpu: 0.0.40
codegen_flags: <defaults>
</compile_context>

<pallas_src>
import functools

import jax
import jax.numpy as jnp
from jax.experimental import pallas as pl

# MXU operand dtype (accumulation is always f32).  bf16 is full-rate on
# v5e/v6e/v7x; set to jnp.float32 for near-exact parity with the reference.
MATMUL_DTYPE = jnp.bfloat16


def _lrelu(x, slope=0.2):
    return jnp.where(x > 0, x, slope * x)


def _mdot(a, b):
    """2-D MXU matmul: operands in MATMUL_DTYPE, f32 accumulation."""
    return jnp.dot(a.astype(MATMUL_DTYPE), b.astype(MATMUL_DTYPE),
                   preferred_element_type=jnp.float32)


def _bmm(a, b):
    """Head-batched MXU matmul (leading batch dim), f32 accumulation."""
    return jnp.einsum("hik,hkj->hij",
                      a.astype(MATMUL_DTYPE), b.astype(MATMUL_DTYPE),
                      preferred_element_type=jnp.float32)


def gnn_kernel(embs_ref, onehot_ref, me_ref,
               wcm_ref, wpc2_ref, bpc_ref,
               va1_ref, v2_ref, ba_ref,
               wch1_ref, wch2_ref, bch_ref,
               out_ref, *, heads, n_nodes, emblen, num_layers):
    """Single invocation: all layers + all heads fused, everything VMEM-resident."""
    N, E, H, L = n_nodes, emblen, heads, num_layers

    # ---- layer-invariant operands, hoisted out of the layer loop -------------
    onehot = jnp.broadcast_to(onehot_ref[...], (H, N * N, N))  # 0/1 gather matrix (bf16)
    me = me_ref[...]                                           # (N, N) additive adjacency mask
    emb = embs_ref[...]                                        # (N, E) f32 embedding carry

    for l in range(L):                                         # static unroll (L small)
        emb_lo = emb.astype(MATMUL_DTYPE)                      # hoisted MXU cast
        emb_b = jnp.broadcast_to(emb_lo, (H, N, E))            # head-batched view

        # ---- folded linear stage (head = leading batch dim, no lane slices) --
        #   cm term : res[j] @ (W^T Wpc_cm) + bpc   (bpc folded pre-broadcast)
        #   pde rows: res    @ (Wpc_pde)            (projected on N unique rows)
        #   rm score: res[i] @ (W^T a1)
        cm_b = _bmm(emb_b, wcm_ref[l]) + bpc_ref[l]            # (H, N, E)
        emb_pc = _bmm(emb_b, wpc2_ref[l])                      # (H, N, E)
        rm = _bmm(emb_b, va1_ref[l])                           # (H, N, 1)

        # ---- gather pde[i,j] = proj(pe[pdj[i,j]]) via exact 0/1 MXU matmul ----
        # (pdj == N, the appended zero row of pe, matches no column -> zero row)
        pde = _bmm(onehot, emb_pc)                             # (H, N*N, E)
        pc1 = _lrelu(pde.reshape(H, N, N, E)
                     + cm_b[:, None, :, :])                    # (H, N, N, E) f32

        # a2 folded through w: score = pc1 . (W^T a2); one batched f32 VPU pass,
        # vreg-aligned (head is sublane-major) — no per-head lane-offset slices.
        sc = jnp.sum(pc1 * v2_ref[l][:, :, None, :], axis=-1)  # (H, N, N)
        logits = _lrelu(rm + sc + ba_ref[l]) + me              # (H, N, N)

        # ---- batched softmax over neighbours (one pass for all heads) --------
        mx = jnp.max(logits, axis=-1, keepdims=True)
        p = jnp.exp(logits - mx)
        att = p * pl.reciprocal(jnp.sum(p, axis=-1, keepdims=True), approx=True)

        # ---- aggregation + output projection ---------------------------------
        nbc = _bmm(att, emb_b)                                 # (H, N, E)
        emb = (_mdot(emb_lo, wch1_ref[l])                      # embs-part, pre-summed over heads
               + bch_ref[l]
               + jnp.sum(_bmm(nbc, wch2_ref[l]), axis=0))      # (N, E)

    out_ref[...] = emb                                         # written exactly once


def _prepare_layer(lp):
    """Fold one layer's raw weights (exact algebraic rewrites), head-batched layout."""
    ww, wpc1, wpc2 = lp["ww"], lp["wpc1"], lp["wpc2"]          # (H, E, E), stored as W.T
    wdt = MATMUL_DTYPE
    return dict(
        wcm=jnp.einsum("hij,hjk->hik", ww, wpc1).astype(wdt),  # (H, E, E)  = W^T Wpc_cm
        wpc2=wpc2.astype(wdt),                                 # (H, E, E)
        bpc=lp["bpc"][:, None, :].astype(jnp.float32),         # (H, 1, E)  f32 (VPU add)
        va1=jnp.einsum("hij,hj->hi", ww, lp["a1"])[..., None].astype(wdt),  # (H, E, 1)
        v2=jnp.einsum("hij,hj->hi", ww, lp["a2"])[:, None, :], # (H, 1, E)  f32 (VPU multiply)
        ba=lp["ba"][:, :, None],                               # (H, 1, 1)  f32
        wch1=jnp.sum(lp["wch1"], axis=0).astype(wdt),          # (E, E)     summed over heads
        wch2=lp["wch2"].astype(wdt),                           # (H, E, E)
        bch=lp["bch"],                                         # (1, E)     f32
    )


def gnn_forward(embs, adj, pdj, params, *, emblen, heads):
    """Forward pass of the whole GNN as a single fused, grid-less pallas_call."""
    N = embs.shape[0]
    E, H, L = emblen, heads, len(params)

    # me = nan_to_num((adj - 1) * inf): 0 where adj==1, finfo(f32).min otherwise
    me = jnp.nan_to_num((adj.astype(jnp.float32) - 1.0) * jnp.inf)
    # layer-invariant 0/1 gather matrix, built once host-side in the MXU dtype
    onehot = (pdj.reshape(N * N, 1)
              == jnp.arange(N, dtype=pdj.dtype)[None, :]).astype(MATMUL_DTYPE)

    prepped = [_prepare_layer(lp) for lp in params]
    stk = {k: jnp.stack([p[k] for p in prepped], axis=0) for k in prepped[0]}

    kernel = functools.partial(gnn_kernel, heads=H, n_nodes=N, emblen=E,
                               num_layers=L)

    # No grid: every operand is a whole-array VMEM resident (<100 KB total),
    # the layer loop runs inside the kernel body.
    return pl.pallas_call(
        kernel,
        out_shape=jax.ShapeDtypeStruct((N, E), jnp.float32),
    )(embs.astype(jnp.float32), onehot, me,
      stk["wcm"], stk["wpc2"], stk["bpc"],
      stk["va1"], stk["v2"], stk["ba"],
      stk["wch1"], stk["wch2"], stk["bch"])


def gnn_reference(embs, adj, pdj, params, *, emblen, heads):
    """Pure-JAX (f32) transliteration of the PyTorch module, for verification."""
    N = embs.shape[0]
    me = jnp.nan_to_num((adj.astype(jnp.float32) - 1.0) * jnp.inf)
    res = embs
    for lp in params:
        pe = jnp.concatenate([res, jnp.zeros((1, emblen), res.dtype)], axis=0)
        pde = pe[pdj]                                              # (N, N, E)
        out = lp["bch"]
        for h in range(heads):
            ww = lp["ww"][h]
            wf = res @ ww                                          # self.w(embs)
            rm = jnp.broadcast_to(wf[:, None, :], (N, N, emblen))
            cm = jnp.broadcast_to(wf[None, :, :], (N, N, emblen))
            pc = cm @ lp["wpc1"][h] + pde @ lp["wpc2"][h] + lp["bpc"][h]
            pc = _lrelu(pc)                                        # lrelu(self.pc(...))
            pc = pc @ ww                                           # self.w(pc)
            mf = _lrelu(rm @ lp["a1"][h] + pc @ lp["a2"][h] + lp["ba"][h])
            att = jax.nn.softmax(mf + me, axis=1)
            nbc = att @ res
            out = out + res @ lp["wch1"][h] + nbc @ lp["wch2"][h]  # MHAG.ch folded per head
        res = out
    return res


def init_params(key, emblen, heads, nodes):
    """Deterministic synthetic weights, stored pre-transposed (in, out)."""
    E, H = emblen, heads
    params = []
    for layer in range(nodes):
        ks = jax.random.split(jax.random.fold_in(key, layer), 10)
        s_e = 1.0 / jnp.sqrt(jnp.float32(E))
        s_2e = 1.0 / jnp.sqrt(jnp.float32(2 * E))
        lp = {
            # GNAH.w  : Linear(E, E, bias=False), stored as W.T  -> (H, E, E)
            "ww":   jax.random.normal(ks[0], (H, E, E), jnp.float32) * s_e,
            # GNAH.pc: Linear(2E, E); W.T split into cm-part / pde-part
            "wpc1": jax.random.normal(ks[1], (H, E, E), jnp.float32) * s_2e,
            "wpc2": jax.random.normal(ks[2], (H, E, E), jnp.float32) * s_2e,
            "bpc":  jax.random.normal(ks[3], (H, E), jnp.float32) * 0.01,
            # GNAH.a : Linear(2E, 1); W.T split into rm-part / pc-part
            "a1":   jax.random.normal(ks[4], (H, E), jnp.float32) * s_2e,
            "a2":   jax.random.normal(ks[5], (H, E), jnp.float32) * s_2e,
            "ba":   jax.random.normal(ks[6], (H, 1), jnp.float32) * 0.01,
            # MHAG.ch: Linear(2*E*H, E); W.T split per head into embs-part / nbc-part
            "wch1": jax.random.normal(ks[7], (H, E, E), jnp.float32)
                    * (1.0 / jnp.sqrt(jnp.float32(2 * E * H))),
            "wch2": jax.random.normal(ks[8], (H, E, E), jnp.float32)
                    * (1.0 / jnp.sqrt(jnp.float32(2 * E * H))),
            "bch":  jax.random.normal(ks[9], (1, E), jnp.float32) * 0.01,
        }
        params.append(lp)
    return params


if __name__ == "__main__":
    emblen, heads, nodes = 32, 2, 2   # GNN(emblen, heads, nodes)
    N = 8                             # number of graph nodes

    key = jax.random.PRNGKey(0)
    k_emb, k_adj, k_pdj, k_par = jax.random.split(key, 4)

    embs = jax.random.normal(k_emb, (N, emblen), jnp.float32)
    adj = (jax.random.uniform(k_adj, (N, N)) > 0.5).astype(jnp.float32)
    adj = adj.at[jnp.arange(N), jnp.arange(N)].set(1.0)        # self loops
    pdj = jax.random.randint(k_pdj, (N, N), 0, N + 1)          # index N -> zero row of pe

    params = init_params(k_par, emblen, heads, nodes)

    out = gnn_forward(embs, adj, pdj, params, emblen=emblen, heads=heads)
    jax.block_until_ready(out)
    assert out.shape == (N, emblen)

    # sanity check against a pure-JAX f32 reference (loose tolerance when the
    # MXU operands are bf16 + approx EUP reciprocal, across 2 layers).
    ref = gnn_reference(embs, adj, pdj, params, emblen=emblen, heads=heads)
    rel_err = float(jnp.linalg.norm(out - ref) / jnp.linalg.norm(ref))
    tol = 2e-2 if MATMUL_DTYPE == jnp.float32 else 8e-2
    assert rel_err < tol, f"relative error {rel_err} exceeds {tol}"

    print("KERNEL_OK")
</pallas_src>

<mosaic_0001>
module attributes {stable_mosaic.version = 11 : i64} {
  func.func @gnn_kernel(%arg0: memref<8x32xf32, #tpu.memory_space<vmem>>, %arg1: memref<64x8xbf16, #tpu.memory_space<vmem>>, %arg2: memref<8x8xf32, #tpu.memory_space<vmem>>, %arg3: memref<2x2x32x32xbf16, #tpu.memory_space<vmem>>, %arg4: memref<2x2x32x32xbf16, #tpu.memory_space<vmem>>, %arg5: memref<2x2x1x32xf32, #tpu.memory_space<vmem>>, %arg6: memref<2x2x32x1xbf16, #tpu.memory_space<vmem>>, %arg7: memref<2x2x1x32xf32, #tpu.memory_space<vmem>>, %arg8: memref<2x2x1x1xf32, #tpu.memory_space<vmem>>, %arg9: memref<2x32x32xbf16, #tpu.memory_space<vmem>>, %arg10: memref<2x2x32x32xbf16, #tpu.memory_space<vmem>>, %arg11: memref<2x1x32xf32, #tpu.memory_space<vmem>>, %arg12: memref<8x32xf32, #tpu.memory_space<vmem>>) attributes {dimension_semantics = [], scalar_prefetch = 0 : i64, scratch_operands = 0 : i64, tpu.core_type = #tpu.core_type<tc>} {
    %c0 = arith.constant 0 : index
    %c0_0 = arith.constant 0 : index
    %0 = vector.load %arg1[%c0, %c0_0] : memref<64x8xbf16, #tpu.memory_space<vmem>>, vector<64x8xbf16>
    %1 = vector.shape_cast %0 : vector<64x8xbf16> to vector<1x64x8xbf16>
    %2 = vector.broadcast %1 : vector<1x64x8xbf16> to vector<2x64x8xbf16>
    %c0_1 = arith.constant 0 : index
    %c0_2 = arith.constant 0 : index
    %3 = vector.load %arg2[%c0_1, %c0_2] : memref<8x8xf32, #tpu.memory_space<vmem>>, vector<8x8xf32>
    %c0_3 = arith.constant 0 : index
    %c0_4 = arith.constant 0 : index
    %4 = vector.load %arg0[%c0_3, %c0_4] : memref<8x32xf32, #tpu.memory_space<vmem>>, vector<8x32xf32>
    %5 = arith.truncf %4 : vector<8x32xf32> to vector<8x32xbf16>
    %6 = vector.shape_cast %5 : vector<8x32xbf16> to vector<1x8x32xbf16>
    %7 = vector.broadcast %6 : vector<1x8x32xbf16> to vector<2x8x32xbf16>
    %c0_5 = arith.constant 0 : index
    %c0_6 = arith.constant 0 : index
    %c0_7 = arith.constant 0 : index
    %c0_8 = arith.constant 0 : index
    %8 = vector.load %arg3[%c0_5, %c0_6, %c0_7, %c0_8] : memref<2x2x32x32xbf16, #tpu.memory_space<vmem>>, vector<1x2x32x32xbf16>
    %9 = vector.shape_cast %8 : vector<1x2x32x32xbf16> to vector<2x32x32xbf16>
    "tpu.trace_start"() <{level = 10 : i32, message = "hik,hkj->hij"}> : () -> ()
    %cst = arith.constant dense<0.000000e+00> : vector<2x8x32xf32>
    %10 = tpu.matmul %7, %9, %cst {dimension_numbers = #tpu.dot_dimension_numbers<[2], [1], [1], [2], [0, 0, 0, 1, 1, 2], [0], [0]>} : vector<2x8x32xbf16>, vector<2x32x32xbf16>, vector<2x8x32xf32> -> vector<2x8x32xf32>
    "tpu.trace_stop"() : () -> ()
    %c0_9 = arith.constant 0 : index
    %c0_10 = arith.constant 0 : index
    %c0_11 = arith.constant 0 : index
    %c0_12 = arith.constant 0 : index
    %11 = vector.load %arg5[%c0_9, %c0_10, %c0_11, %c0_12] : memref<2x2x1x32xf32, #tpu.memory_space<vmem>>, vector<1x2x1x32xf32>
    %12 = vector.shape_cast %11 : vector<1x2x1x32xf32> to vector<2x1x32xf32>
    %13 = vector.broadcast %12 : vector<2x1x32xf32> to vector<2x8x32xf32>
    %14 = arith.addf %10, %13 : vector<2x8x32xf32>
    %c0_13 = arith.constant 0 : index
    %c0_14 = arith.constant 0 : index
    %c0_15 = arith.constant 0 : index
    %c0_16 = arith.constant 0 : index
    %15 = vector.load %arg4[%c0_13, %c0_14, %c0_15, %c0_16] : memref<2x2x32x32xbf16, #tpu.memory_space<vmem>>, vector<1x2x32x32xbf16>
    %16 = vector.shape_cast %15 : vector<1x2x32x32xbf16> to vector<2x32x32xbf16>
    "tpu.trace_start"() <{level = 10 : i32, message = "hik,hkj->hij"}> : () -> ()
    %cst_17 = arith.constant dense<0.000000e+00> : vector<2x8x32xf32>
    %17 = tpu.matmul %7, %16, %cst_17 {dimension_numbers = #tpu.dot_dimension_numbers<[2], [1], [1], [2], [0, 0, 0, 1, 1, 2], [0], [0]>} : vector<2x8x32xbf16>, vector<2x32x32xbf16>, vector<2x8x32xf32> -> vector<2x8x32xf32>
    "tpu.trace_stop"() : () -> ()
    %c0_18 = arith.constant 0 : index
    %c0_19 = arith.constant 0 : index
    %c0_20 = arith.constant 0 : index
    %c0_21 = arith.constant 0 : index
    %18 = vector.load %arg6[%c0_18, %c0_19, %c0_20, %c0_21] : memref<2x2x32x1xbf16, #tpu.memory_space<vmem>>, vector<1x2x32x1xbf16>
    %19 = vector.shape_cast %18 : vector<1x2x32x1xbf16> to vector<2x32x1xbf16>
    "tpu.trace_start"() <{level = 10 : i32, message = "hik,hkj->hij"}> : () -> ()
    %cst_22 = arith.constant dense<0.000000e+00> : vector<2x8x1xf32>
    %20 = tpu.matmul %7, %19, %cst_22 {dimension_numbers = #tpu.dot_dimension_numbers<[2], [1], [1], [2], [0, 0, 0, 1, 1, 2], [0], [0]>} : vector<2x8x32xbf16>, vector<2x32x1xbf16>, vector<2x8x1xf32> -> vector<2x8x1xf32>
    "tpu.trace_stop"() : () -> ()
    %21 = arith.truncf %17 : vector<2x8x32xf32> to vector<2x8x32xbf16>
    "tpu.trace_start"() <{level = 10 : i32, message = "hik,hkj->hij"}> : () -> ()
    %cst_23 = arith.constant dense<0.000000e+00> : vector<2x64x32xf32>
    %22 = tpu.matmul %2, %21, %cst_23 {dimension_numbers = #tpu.dot_dimension_numbers<[2], [1], [1], [2], [0, 0, 0, 1, 1, 2], [0], [0]>} : vector<2x64x8xbf16>, vector<2x8x32xbf16>, vector<2x64x32xf32> -> vector<2x64x32xf32>
    "tpu.trace_stop"() : () -> ()
    %23 = vector.shape_cast %22 : vector<2x64x32xf32> to vector<2x8x8x32xf32>
    %24 = vector.shape_cast %14 : vector<2x8x32xf32> to vector<2x1x8x32xf32>
    %25 = vector.broadcast %24 : vector<2x1x8x32xf32> to vector<2x8x8x32xf32>
    %26 = arith.addf %23, %25 : vector<2x8x8x32xf32>
    %cst_24 = arith.constant 0.000000e+00 : f32
    %27 = vector.broadcast %cst_24 : f32 to vector<2x8x8x32xf32>
    %28 = arith.cmpf ogt, %26, %27 : vector<2x8x8x32xf32>
    %cst_25 = arith.constant 2.000000e-01 : f32
    %29 = vector.broadcast %cst_25 : f32 to vector<2x8x8x32xf32>
    %30 = arith.mulf %29, %26 : vector<2x8x8x32xf32>
    %31 = arith.select %28, %26, %30 : vector<2x8x8x32xi1>, vector<2x8x8x32xf32>
    %c0_26 = arith.constant 0 : index
    %c0_27 = arith.constant 0 : index
    %c0_28 = arith.constant 0 : index
    %c0_29 = arith.constant 0 : index
    %32 = vector.load %arg7[%c0_26, %c0_27, %c0_28, %c0_29] : memref<2x2x1x32xf32, #tpu.memory_space<vmem>>, vector<1x2x1x32xf32>
    %33 = vector.shape_cast %32 : vector<1x2x1x32xf32> to vector<2x1x32xf32>
    %34 = vector.shape_cast %33 : vector<2x1x32xf32> to vector<2x1x1x32xf32>
    %35 = vector.broadcast %34 : vector<2x1x1x32xf32> to vector<2x8x8x32xf32>
    %36 = arith.mulf %31, %35 : vector<2x8x8x32xf32>
    %cst_30 = arith.constant dense<0.000000e+00> : vector<2x8x8xf32>
    %37 = vector.multi_reduction <add>, %36, %cst_30 [3] : vector<2x8x8x32xf32> to vector<2x8x8xf32>
    %38 = vector.broadcast %20 : vector<2x8x1xf32> to vector<2x8x8xf32>
    %39 = arith.addf %38, %37 : vector<2x8x8xf32>
    %c0_31 = arith.constant 0 : index
    %c0_32 = arith.constant 0 : index
    %c0_33 = arith.constant 0 : index
    %c0_34 = arith.constant 0 : index
    %40 = vector.load %arg8[%c0_31, %c0_32, %c0_33, %c0_34] : memref<2x2x1x1xf32, #tpu.memory_space<vmem>>, vector<1x2x1x1xf32>
    %41 = vector.shape_cast %40 : vector<1x2x1x1xf32> to vector<2x1x1xf32>
    %42 = vector.broadcast %41 : vector<2x1x1xf32> to vector<2x8x8xf32>
    %43 = arith.addf %39, %42 : vector<2x8x8xf32>
    %cst_35 = arith.constant 0.000000e+00 : f32
    %44 = vector.broadcast %cst_35 : f32 to vector<2x8x8xf32>
    %45 = arith.cmpf ogt, %43, %44 : vector<2x8x8xf32>
    %cst_36 = arith.constant 2.000000e-01 : f32
    %46 = vector.broadcast %cst_36 : f32 to vector<2x8x8xf32>
    %47 = arith.mulf %46, %43 : vector<2x8x8xf32>
    %48 = arith.select %45, %43, %47 : vector<2x8x8xi1>, vector<2x8x8xf32>
    %49 = vector.shape_cast %3 : vector<8x8xf32> to vector<1x8x8xf32>
    %50 = vector.broadcast %49 : vector<1x8x8xf32> to vector<2x8x8xf32>
    %51 = arith.addf %48, %50 : vector<2x8x8xf32>
    %cst_37 = arith.constant dense<0xFF800000> : vector<2x8xf32>
    %52 = vector.multi_reduction <maximumf>, %51, %cst_37 [2] : vector<2x8x8xf32> to vector<2x8xf32>
    %53 = vector.shape_cast %52 : vector<2x8xf32> to vector<2x8x1xf32>
    %54 = vector.broadcast %53 : vector<2x8x1xf32> to vector<2x8x8xf32>
    %55 = arith.subf %51, %54 : vector<2x8x8xf32>
    %56 = math.exp %55 : vector<2x8x8xf32>
    %cst_38 = arith.constant dense<0.000000e+00> : vector<2x8xf32>
    %57 = vector.multi_reduction <add>, %56, %cst_38 [2] : vector<2x8x8xf32> to vector<2x8xf32>
    %58 = vector.shape_cast %57 : vector<2x8xf32> to vector<2x8x1xf32>
    %59 = tpu.reciprocal %58 {approx = true} : vector<2x8x1xf32> -> vector<2x8x1xf32>
    %60 = vector.broadcast %59 : vector<2x8x1xf32> to vector<2x8x8xf32>
    %61 = arith.mulf %56, %60 : vector<2x8x8xf32>
    %62 = arith.truncf %61 : vector<2x8x8xf32> to vector<2x8x8xbf16>
    "tpu.trace_start"() <{level = 10 : i32, message = "hik,hkj->hij"}> : () -> ()
    %cst_39 = arith.constant dense<0.000000e+00> : vector<2x8x32xf32>
    %63 = tpu.matmul %62, %7, %cst_39 {dimension_numbers = #tpu.dot_dimension_numbers<[2], [1], [1], [2], [0, 0, 0, 1, 1, 2], [0], [0]>} : vector<2x8x8xbf16>, vector<2x8x32xbf16>, vector<2x8x32xf32> -> vector<2x8x32xf32>
    "tpu.trace_stop"() : () -> ()
    %c0_40 = arith.constant 0 : index
    %c0_41 = arith.constant 0 : index
    %c0_42 = arith.constant 0 : index
    %64 = vector.load %arg9[%c0_40, %c0_41, %c0_42] : memref<2x32x32xbf16, #tpu.memory_space<vmem>>, vector<1x32x32xbf16>
    %65 = vector.shape_cast %64 : vector<1x32x32xbf16> to vector<32x32xbf16>
    %cst_43 = arith.constant dense<0.000000e+00> : vector<8x32xf32>
    %66 = tpu.matmul %5, %65, %cst_43 {dimension_numbers = #tpu.dot_dimension_numbers<[1], [0], [0], [1], [0, 0, 1, 1], [], []>} : vector<8x32xbf16>, vector<32x32xbf16>, vector<8x32xf32> -> vector<8x32xf32>
    %c0_44 = arith.constant 0 : index
    %c0_45 = arith.constant 0 : index
    %c0_46 = arith.constant 0 : index
    %67 = vector.load %arg11[%c0_44, %c0_45, %c0_46] : memref<2x1x32xf32, #tpu.memory_space<vmem>>, vector<1x1x32xf32>
    %68 = vector.shape_cast %67 : vector<1x1x32xf32> to vector<1x32xf32>
    %69 = vector.broadcast %68 : vector<1x32xf32> to vector<8x32xf32>
    %70 = arith.addf %66, %69 : vector<8x32xf32>
    %c0_47 = arith.constant 0 : index
    %c0_48 = arith.constant 0 : index
    %c0_49 = arith.constant 0 : index
    %c0_50 = arith.constant 0 : index
    %71 = vector.load %arg10[%c0_47, %c0_48, %c0_49, %c0_50] : memref<2x2x32x32xbf16, #tpu.memory_space<vmem>>, vector<1x2x32x32xbf16>
    %72 = vector.shape_cast %71 : vector<1x2x32x32xbf16> to vector<2x32x32xbf16>
    %73 = arith.truncf %63 : vector<2x8x32xf32> to vector<2x8x32xbf16>
    "tpu.trace_start"() <{level = 10 : i32, message = "hik,hkj->hij"}> : () -> ()
    %cst_51 = arith.constant dense<0.000000e+00> : vector<2x8x32xf32>
    %74 = tpu.matmul %73, %72, %cst_51 {dimension_numbers = #tpu.dot_dimension_numbers<[2], [1], [1], [2], [0, 0, 0, 1, 1, 2], [0], [0]>} : vector<2x8x32xbf16>, vector<2x32x32xbf16>, vector<2x8x32xf32> -> vector<2x8x32xf32>
    "tpu.trace_stop"() : () -> ()
    %cst_52 = arith.constant dense<0.000000e+00> : vector<8x32xf32>
    %75 = vector.multi_reduction <add>, %74, %cst_52 [0] : vector<2x8x32xf32> to vector<8x32xf32>
    %76 = arith.addf %70, %75 : vector<8x32xf32>
    %77 = arith.truncf %76 : vector<8x32xf32> to vector<8x32xbf16>
    %78 = vector.shape_cast %77 : vector<8x32xbf16> to vector<1x8x32xbf16>
    %79 = vector.broadcast %78 : vector<1x8x32xbf16> to vector<2x8x32xbf16>
    %c1 = arith.constant 1 : index
    %c0_53 = arith.constant 0 : index
    %c0_54 = arith.constant 0 : index
    %c0_55 = arith.constant 0 : index
    %80 = vector.load %arg3[%c1, %c0_53, %c0_54, %c0_55] : memref<2x2x32x32xbf16, #tpu.memory_space<vmem>>, vector<1x2x32x32xbf16>
    %81 = vector.shape_cast %80 : vector<1x2x32x32xbf16> to vector<2x32x32xbf16>
    "tpu.trace_start"() <{level = 10 : i32, message = "hik,hkj->hij"}> : () -> ()
    %cst_56 = arith.constant dense<0.000000e+00> : vector<2x8x32xf32>
    %82 = tpu.matmul %79, %81, %cst_56 {dimension_numbers = #tpu.dot_dimension_numbers<[2], [1], [1], [2], [0, 0, 0, 1, 1, 2], [0], [0]>} : vector<2x8x32xbf16>, vector<2x32x32xbf16>, vector<2x8x32xf32> -> vector<2x8x32xf32>
    "tpu.trace_stop"() : () -> ()
    %c1_57 = arith.constant 1 : index
    %c0_58 = arith.constant 0 : index
    %c0_59 = arith.constant 0 : index
    %c0_60 = arith.constant 0 : index
    %83 = vector.load %arg5[%c1_57, %c0_58, %c0_59, %c0_60] : memref<2x2x1x32xf32, #tpu.memory_space<vmem>>, vector<1x2x1x32xf32>
    %84 = vector.shape_cast %83 : vector<1x2x1x32xf32> to vector<2x1x32xf32>
    %85 = vector.broadcast %84 : vector<2x1x32xf32> to vector<2x8x32xf32>
    %86 = arith.addf %82, %85 : vector<2x8x32xf32>
    %c1_61 = arith.constant 1 : index
    %c0_62 = arith.constant 0 : index
    %c0_63 = arith.constant 0 : index
    %c0_64 = arith.constant 0 : index
    %87 = vector.load %arg4[%c1_61, %c0_62, %c0_63, %c0_64] : memref<2x2x32x32xbf16, #tpu.memory_space<vmem>>, vector<1x2x32x32xbf16>
    %88 = vector.shape_cast %87 : vector<1x2x32x32xbf16> to vector<2x32x32xbf16>
    "tpu.trace_start"() <{level = 10 : i32, message = "hik,hkj->hij"}> : () -> ()
    %cst_65 = arith.constant dense<0.000000e+00> : vector<2x8x32xf32>
    %89 = tpu.matmul %79, %88, %cst_65 {dimension_numbers = #tpu.dot_dimension_numbers<[2], [1], [1], [2], [0, 0, 0, 1, 1, 2], [0], [0]>} : vector<2x8x32xbf16>, vector<2x32x32xbf16>, vector<2x8x32xf32> -> vector<2x8x32xf32>
    "tpu.trace_stop"() : () -> ()
    %c1_66 = arith.constant 1 : index
    %c0_67 = arith.constant 0 : index
    %c0_68 = arith.constant 0 : index
    %c0_69 = arith.constant 0 : index
    %90 = vector.load %arg6[%c1_66, %c0_67, %c0_68, %c0_69] : memref<2x2x32x1xbf16, #tpu.memory_space<vmem>>, vector<1x2x32x1xbf16>
    %91 = vector.shape_cast %90 : vector<1x2x32x1xbf16> to vector<2x32x1xbf16>
    "tpu.trace_start"() <{level = 10 : i32, message = "hik,hkj->hij"}> : () -> ()
    %cst_70 = arith.constant dense<0.000000e+00> : vector<2x8x1xf32>
    %92 = tpu.matmul %79, %91, %cst_70 {dimension_numbers = #tpu.dot_dimension_numbers<[2], [1], [1], [2], [0, 0, 0, 1, 1, 2], [0], [0]>} : vector<2x8x32xbf16>, vector<2x32x1xbf16>, vector<2x8x1xf32> -> vector<2x8x1xf32>
    "tpu.trace_stop"() : () -> ()
    %93 = arith.truncf %89 : vector<2x8x32xf32> to vector<2x8x32xbf16>
    "tpu.trace_start"() <{level = 10 : i32, message = "hik,hkj->hij"}> : () -> ()
    %cst_71 = arith.constant dense<0.000000e+00> : vector<2x64x32xf32>
    %94 = tpu.matmul %2, %93, %cst_71 {dimension_numbers = #tpu.dot_dimension_numbers<[2], [1], [1], [2], [0, 0, 0, 1, 1, 2], [0], [0]>} : vector<2x64x8xbf16>, vector<2x8x32xbf16>, vector<2x64x32xf32> -> vector<2x64x32xf32>
    "tpu.trace_stop"() : () -> ()
    %95 = vector.shape_cast %94 : vector<2x64x32xf32> to vector<2x8x8x32xf32>
    %96 = vector.shape_cast %86 : vector<2x8x32xf32> to vector<2x1x8x32xf32>
    %97 = vector.broadcast %96 : vector<2x1x8x32xf32> to vector<2x8x8x32xf32>
    %98 = arith.addf %95, %97 : vector<2x8x8x32xf32>
    %cst_72 = arith.constant 0.000000e+00 : f32
    %99 = vector.broadcast %cst_72 : f32 to vector<2x8x8x32xf32>
    %100 = arith.cmpf ogt, %98, %99 : vector<2x8x8x32xf32>
    %cst_73 = arith.constant 2.000000e-01 : f32
    %101 = vector.broadcast %cst_73 : f32 to vector<2x8x8x32xf32>
    %102 = arith.mulf %101, %98 : vector<2x8x8x32xf32>
    %103 = arith.select %100, %98, %102 : vector<2x8x8x32xi1>, vector<2x8x8x32xf32>
    %c1_74 = arith.constant 1 : index
    %c0_75 = arith.constant 0 : index
    %c0_76 = arith.constant 0 : index
    %c0_77 = arith.constant 0 : index
    %104 = vector.load %arg7[%c1_74, %c0_75, %c0_76, %c0_77] : memref<2x2x1x32xf32, #tpu.memory_space<vmem>>, vector<1x2x1x32xf32>
    %105 = vector.shape_cast %104 : vector<1x2x1x32xf32> to vector<2x1x32xf32>
    %106 = vector.shape_cast %105 : vector<2x1x32xf32> to vector<2x1x1x32xf32>
    %107 = vector.broadcast %106 : vector<2x1x1x32xf32> to vector<2x8x8x32xf32>
    %108 = arith.mulf %103, %107 : vector<2x8x8x32xf32>
    %cst_78 = arith.constant dense<0.000000e+00> : vector<2x8x8xf32>
    %109 = vector.multi_reduction <add>, %108, %cst_78 [3] : vector<2x8x8x32xf32> to vector<2x8x8xf32>
    %110 = vector.broadcast %92 : vector<2x8x1xf32> to vector<2x8x8xf32>
    %111 = arith.addf %110, %109 : vector<2x8x8xf32>
    %c1_79 = arith.constant 1 : index
    %c0_80 = arith.constant 0 : index
    %c0_81 = arith.constant 0 : index
    %c0_82 = arith.constant 0 : index
    %112 = vector.load %arg8[%c1_79, %c0_80, %c0_81, %c0_82] : memref<2x2x1x1xf32, #tpu.memory_space<vmem>>, vector<1x2x1x1xf32>
    %113 = vector.shape_cast %112 : vector<1x2x1x1xf32> to vector<2x1x1xf32>
    %114 = vector.broadcast %113 : vector<2x1x1xf32> to vector<2x8x8xf32>
    %115 = arith.addf %111, %114 : vector<2x8x8xf32>
    %cst_83 = arith.constant 0.000000e+00 : f32
    %116 = vector.broadcast %cst_83 : f32 to vector<2x8x8xf32>
    %117 = arith.cmpf ogt, %115, %116 : vector<2x8x8xf32>
    %cst_84 = arith.constant 2.000000e-01 : f32
    %118 = vector.broadcast %cst_84 : f32 to vector<2x8x8xf32>
    %119 = arith.mulf %118, %115 : vector<2x8x8xf32>
    %120 = arith.select %117, %115, %119 : vector<2x8x8xi1>, vector<2x8x8xf32>
    %121 = vector.shape_cast %3 : vector<8x8xf32> to vector<1x8x8xf32>
    %122 = vector.broadcast %121 : vector<1x8x8xf32> to vector<2x8x8xf32>
    %123 = arith.addf %120, %122 : vector<2x8x8xf32>
    %cst_85 = arith.constant dense<0xFF800000> : vector<2x8xf32>
    %124 = vector.multi_reduction <maximumf>, %123, %cst_85 [2] : vector<2x8x8xf32> to vector<2x8xf32>
    %125 = vector.shape_cast %124 : vector<2x8xf32> to vector<2x8x1xf32>
    %126 = vector.broadcast %125 : vector<2x8x1xf32> to vector<2x8x8xf32>
    %127 = arith.subf %123, %126 : vector<2x8x8xf32>
    %128 = math.exp %127 : vector<2x8x8xf32>
    %cst_86 = arith.constant dense<0.000000e+00> : vector<2x8xf32>
    %129 = vector.multi_reduction <add>, %128, %cst_86 [2] : vector<2x8x8xf32> to vector<2x8xf32>
    %130 = vector.shape_cast %129 : vector<2x8xf32> to vector<2x8x1xf32>
    %131 = tpu.reciprocal %130 {approx = true} : vector<2x8x1xf32> -> vector<2x8x1xf32>
    %132 = vector.broadcast %131 : vector<2x8x1xf32> to vector<2x8x8xf32>
    %133 = arith.mulf %128, %132 : vector<2x8x8xf32>
    %134 = arith.truncf %133 : vector<2x8x8xf32> to vector<2x8x8xbf16>
    "tpu.trace_start"() <{level = 10 : i32, message = "hik,hkj->hij"}> : () -> ()
    %cst_87 = arith.constant dense<0.000000e+00> : vector<2x8x32xf32>
    %135 = tpu.matmul %134, %79, %cst_87 {dimension_numbers = #tpu.dot_dimension_numbers<[2], [1], [1], [2], [0, 0, 0, 1, 1, 2], [0], [0]>} : vector<2x8x8xbf16>, vector<2x8x32xbf16>, vector<2x8x32xf32> -> vector<2x8x32xf32>
    "tpu.trace_stop"() : () -> ()
    %c1_88 = arith.constant 1 : index
    %c0_89 = arith.constant 0 : index
    %c0_90 = arith.constant 0 : index
    %136 = vector.load %arg9[%c1_88, %c0_89, %c0_90] : memref<2x32x32xbf16, #tpu.memory_space<vmem>>, vector<1x32x32xbf16>
    %137 = vector.shape_cast %136 : vector<1x32x32xbf16> to vector<32x32xbf16>
    %cst_91 = arith.constant dense<0.000000e+00> : vector<8x32xf32>
    %138 = tpu.matmul %77, %137, %cst_91 {dimension_numbers = #tpu.dot_dimension_numbers<[1], [0], [0], [1], [0, 0, 1, 1], [], []>} : vector<8x32xbf16>, vector<32x32xbf16>, vector<8x32xf32> -> vector<8x32xf32>
    %c1_92 = arith.constant 1 : index
    %c0_93 = arith.constant 0 : index
    %c0_94 = arith.constant 0 : index
    %139 = vector.load %arg11[%c1_92, %c0_93, %c0_94] : memref<2x1x32xf32, #tpu.memory_space<vmem>>, vector<1x1x32xf32>
    %140 = vector.shape_cast %139 : vector<1x1x32xf32> to vector<1x32xf32>
    %141 = vector.broadcast %140 : vector<1x32xf32> to vector<8x32xf32>
    %142 = arith.addf %138, %141 : vector<8x32xf32>
    %c1_95 = arith.constant 1 : index
    %c0_96 = arith.constant 0 : index
    %c0_97 = arith.constant 0 : index
    %c0_98 = arith.constant 0 : index
    %143 = vector.load %arg10[%c1_95, %c0_96, %c0_97, %c0_98] : memref<2x2x32x32xbf16, #tpu.memory_space<vmem>>, vector<1x2x32x32xbf16>
    %144 = vector.shape_cast %143 : vector<1x2x32x32xbf16> to vector<2x32x32xbf16>
    %145 = arith.truncf %135 : vector<2x8x32xf32> to vector<2x8x32xbf16>
    "tpu.trace_start"() <{level = 10 : i32, message = "hik,hkj->hij"}> : () -> ()
    %cst_99 = arith.constant dense<0.000000e+00> : vector<2x8x32xf32>
    %146 = tpu.matmul %145, %144, %cst_99 {dimension_numbers = #tpu.dot_dimension_numbers<[2], [1], [1], [2], [0, 0, 0, 1, 1, 2], [0], [0]>} : vector<2x8x32xbf16>, vector<2x32x32xbf16>, vector<2x8x32xf32> -> vector<2x8x32xf32>
    "tpu.trace_stop"() : () -> ()
    %cst_100 = arith.constant dense<0.000000e+00> : vector<8x32xf32>
    %147 = vector.multi_reduction <add>, %146, %cst_100 [0] : vector<2x8x32xf32> to vector<8x32xf32>
    %148 = arith.addf %142, %147 : vector<8x32xf32>
    %c0_101 = arith.constant 0 : index
    %c0_102 = arith.constant 0 : index
    %149 = vector.load %arg12[%c0_101, %c0_102] : memref<8x32xf32, #tpu.memory_space<vmem>>, vector<8x32xf32>
    tpu.vector_store %arg12[%c0_101, %c0_102], %148 {strides = array<i32>} : memref<8x32xf32, #tpu.memory_space<vmem>>, vector<8x32xf32>,
    return
  }
}

</mosaic_0001>

<llo_original>
// kernel: tpu_custom_call.1
$region0: #{tpu_custom_call.1}
  #allocation0 [shape = 'u32[]', space=smem, size = 0x4, offset = 0x4, fixed_abs, tag = 'smem constant byte address 0x4 - core index']
  #allocation1 [shape = 'u32[144,128]{1,0:T(1,128)}', space=vmem, size = 0x12000, scoped, tag = 'internal scratch']
  %s0 = inlined_call_operand.hbm [shape: f32[8,32], index: 0, kind: input, shape index: {}]
  %s1 = inlined_call_operand.vmem [shape: bf16[64,8], index: 1, kind: input, shape index: {}]
  %s2 = inlined_call_operand.hbm [shape: f32[8,8], index: 2, kind: input, shape index: {}]
  %s3 = inlined_call_operand.vmem [shape: bf16[2,2,32,32], index: 3, kind: input, shape index: {}]
  %s4 = inlined_call_operand.hbm [shape: bf16[2,2,32,32], index: 4, kind: input, shape index: {}]
  %s5 = inlined_call_operand.hbm [shape: f32[2,2,1,32], index: 5, kind: input, shape index: {}]
  %s6 = inlined_call_operand.vmem [shape: bf16[2,2,32,1], index: 6, kind: input, shape index: {}]
  %s7 = inlined_call_operand.vmem [shape: f32[2,2,1,32], index: 7, kind: input, shape index: {}]
  %s8 = inlined_call_operand.vmem [shape: f32[2,2,1,1], index: 8, kind: input, shape index: {}]
  %s9 = inlined_call_operand.hbm [shape: bf16[2,32,32], index: 9, kind: input, shape index: {}]
  %s10 = inlined_call_operand.vmem [shape: bf16[2,2,32,32], index: 10, kind: input, shape index: {}]
  %s11 = inlined_call_operand.vmem [shape: f32[2,1,32], index: 11, kind: input, shape index: {}]
  %s12 = inlined_call_operand.hbm [shape: f32[8,32], index: 12, kind: output, shape index: {}]
  %s13 = sld [smem:[#allocation0]]
  $region78: #{tpu_custom_call.1} parent=0
    _
  %s15 = ssub.s32 1, %s13
  %s16 = scalar_select 0, %s15, %s13
  $region1: #{tpu_custom_call.1} parent=0
    #allocation2 [shape = 'u8[4096]{0}', space=vmem, size = 0x1000, scoped, tag = 'input window, operand 0, single buffered']
    #allocation3 [shape = 's32[1]{0}', space=sflag, size = 0x4, scoped, tag = 'scoped memory for tpu_custom_call.1']
    #allocation4 [shape = 's32[1]{0}', space=sflag, size = 0x4, scoped, tag = 'scoped memory for tpu_custom_call.1']
    #allocation5 [shape = 'u8[4096]{0}', space=vmem, size = 0x1000, scoped, tag = 'input window, operand 2, single buffered']
    #allocation6 [shape = 's32[1]{0}', space=sflag, size = 0x4, scoped, tag = 'scoped memory for tpu_custom_call.1']
    #allocation7 [shape = 'u8[32768]{0}', space=vmem, size = 0x8000, scoped, tag = 'input window, operand 4, single buffered']
    #allocation8 [shape = 'u8[2048]{0}', space=vmem, size = 0x800, scoped, tag = 'input window, operand 5, single buffered']
    #allocation9 [shape = 's32[1]{0}', space=sflag, size = 0x4, scoped, tag = 'scoped memory for tpu_custom_call.1']
    #allocation10 [shape = 'u8[16384]{0}', space=vmem, size = 0x4000, scoped, tag = 'input window, operand 9, single buffered']
    #allocation11 [shape = 'u8[4096]{0}', space=vmem, size = 0x1000, scoped, tag = 'output window, operand 0, single buffered']
    %17 = vsyncpa [#allocation3], 0
    %18 = vsyncpa [#allocation6], 0
    %19 = vsyncpa [#allocation9], 0
    %20 = vsyncpa [#allocation4], 0
    // Predicated region
    $region2: #{tpu_custom_call.1} parent=1 // pred_check
      _
    $region3: #{tpu_custom_call.1} parent=1 // pred_check_branch
      %22 = sbr.rel (0) target = $region5
    $region4: #{tpu_custom_call.1} parent=1 // pred_region
      %s24 = ssub.s32 128, 128
      %25 = vsyncadd [#allocation3], %s24
      %s27 = sshll.u32 [#allocation2], 4
      %s28 = int_to_ptr.vmem [resolvable:$true] %s27
      %30 = dma.hbm_to_vmem [thread:$0]  %s0, 128, %s28, [#allocation3]
    $region5: #{tpu_custom_call.1} parent=1 // pred_fallthru
      _
    // Predicated region
    $region6: #{tpu_custom_call.1} parent=1 // pred_check
      _
    $region7: #{tpu_custom_call.1} parent=1 // pred_check_branch
      %32 = sbr.rel (0) target = $region9
    $region8: #{tpu_custom_call.1} parent=1 // pred_region
      _
    $region9: #{tpu_custom_call.1} parent=1 // pred_fallthru
      _
    // Predicated region
    $region10: #{tpu_custom_call.1} parent=1 // pred_check
      _
    $region11: #{tpu_custom_call.1} parent=1 // pred_check_branch
      %34 = sbr.rel (0) target = $region13
    $region12: #{tpu_custom_call.1} parent=1 // pred_region
      %s36 = ssub.s32 128, 128
      %37 = vsyncadd [#allocation6], %s36
      %s39 = sshll.u32 [#allocation5], 4
      %s40 = int_to_ptr.vmem [resolvable:$true] %s39
      %42 = dma.hbm_to_vmem [thread:$0]  %s2, 128, %s40, [#allocation6]
    $region13: #{tpu_custom_call.1} parent=1 // pred_fallthru
      _
    // Predicated region
    $region14: #{tpu_custom_call.1} parent=1 // pred_check
      _
    $region15: #{tpu_custom_call.1} parent=1 // pred_check_branch
      %44 = sbr.rel (0) target = $region17
    $region16: #{tpu_custom_call.1} parent=1 // pred_region
      _
    $region17: #{tpu_custom_call.1} parent=1 // pred_fallthru
      _
    // Predicated region
    $region18: #{tpu_custom_call.1} parent=1 // pred_check
      _
    $region19: #{tpu_custom_call.1} parent=1 // pred_check_branch
      %46 = sbr.rel (0) target = $region21
    $region20: #{tpu_custom_call.1} parent=1 // pred_region
      %s48 = ssub.s32 1024, 1024
      %49 = vsyncadd [#allocation6], %s48
      %s50 = sshll.u32 [#allocation7], 4
      %s51 = int_to_ptr.vmem [resolvable:$true] %s50
      %56 = dma.hbm_to_vmem [thread:$0]  %s4, 1024, %s51, [#allocation6], 64, 64, 4
    $region21: #{tpu_custom_call.1} parent=1 // pred_fallthru
      _
    // Predicated region
    $region22: #{tpu_custom_call.1} parent=1 // pred_check
      _
    $region23: #{tpu_custom_call.1} parent=1 // pred_check_branch
      %58 = sbr.rel (0) target = $region25
    $region24: #{tpu_custom_call.1} parent=1 // pred_region
      %s60 = ssub.s32 64, 64
      %61 = vsyncadd [#allocation9], %s60
      %s62 = sshll.u32 [#allocation8], 4
      %s63 = int_to_ptr.vmem [resolvable:$true] %s62
      %68 = dma.hbm_to_vmem [thread:$0]  %s5, 64, %s63, [#allocation9], 16, 16, 1
    $region25: #{tpu_custom_call.1} parent=1 // pred_fallthru
      _
    // Predicated region
    $region26: #{tpu_custom_call.1} parent=1 // pred_check
      _
    $region27: #{tpu_custom_call.1} parent=1 // pred_check_branch
      %70 = sbr.rel (0) target = $region29
    $region28: #{tpu_custom_call.1} parent=1 // pred_region
      _
    $region29: #{tpu_custom_call.1} parent=1 // pred_fallthru
      _
    // Predicated region
    $region30: #{tpu_custom_call.1} parent=1 // pred_check
      _
    $region31: #{tpu_custom_call.1} parent=1 // pred_check_branch
      %72 = sbr.rel (0) target = $region33
    $region32: #{tpu_custom_call.1} parent=1 // pred_region
      _
    $region33: #{tpu_custom_call.1} parent=1 // pred_fallthru
      _
    // Predicated region
    $region34: #{tpu_custom_call.1} parent=1 // pred_check
      _
    $region35: #{tpu_custom_call.1} parent=1 // pred_check_branch
      %74 = sbr.rel (0) target = $region37
    $region36: #{tpu_custom_call.1} parent=1 // pred_region
      _
    $region37: #{tpu_custom_call.1} parent=1 // pred_fallthru
      _
    // Predicated region
    $region38: #{tpu_custom_call.1} parent=1 // pred_check
      _
    $region39: #{tpu_custom_call.1} parent=1 // pred_check_branch
      %76 = sbr.rel (0) target = $region41
    $region40: #{tpu_custom_call.1} parent=1 // pred_region
      %s78 = ssub.s32 512, 512
      %79 = vsyncadd [#allocation9], %s78
      %s80 = sshll.u32 [#allocation10], 4
      %s81 = int_to_ptr.vmem [resolvable:$true] %s80
      %86 = dma.hbm_to_vmem [thread:$0]  %s9, 512, %s81, [#allocation9], 64, 64, 4
    $region41: #{tpu_custom_call.1} parent=1 // pred_fallthru
      _
    // Predicated region
    $region42: #{tpu_custom_call.1} parent=1 // pred_check
      _
    $region43: #{tpu_custom_call.1} parent=1 // pred_check_branch
      %88 = sbr.rel (0) target = $region45
    $region44: #{tpu_custom_call.1} parent=1 // pred_region
      _
    $region45: #{tpu_custom_call.1} parent=1 // pred_fallthru
      _
    // Predicated region
    $region46: #{tpu_custom_call.1} parent=1 // pred_check
      _
    $region47: #{tpu_custom_call.1} parent=1 // pred_check_branch
      %90 = sbr.rel (0) target = $region49
    $region48: #{tpu_custom_call.1} parent=1 // pred_region
      _
    $region49: #{tpu_custom_call.1} parent=1 // pred_fallthru
      _
    // Predicated region
    $region50: #{tpu_custom_call.1} parent=1 // pred_check
      _
    $region51: #{tpu_custom_call.1} parent=1 // pred_check_branch
      %92 = sbr.rel (0) target = $region53
    $region52: #{tpu_custom_call.1} parent=1 // pred_region
      %93 = dma.done [#allocation3], 128
    $region53: #{tpu_custom_call.1} parent=1 // pred_fallthru
      _
    // Predicated region
    $region54: #{tpu_custom_call.1} parent=1 // pred_check
      _
    $region55: #{tpu_custom_call.1} parent=1 // pred_check_branch
      %95 = sbr.rel (0) target = $region57
    $region56: #{tpu_custom_call.1} parent=1 // pred_region
      %96 = dma.done [#allocation6], 128
    $region57: #{tpu_custom_call.1} parent=1 // pred_fallthru
      _
    // Predicated region
    $region58: #{tpu_custom_call.1} parent=1 // pred_check
      _
    $region59: #{tpu_custom_call.1} parent=1 // pred_check_branch
      %98 = sbr.rel (0) target = $region61
    $region60: #{tpu_custom_call.1} parent=1 // pred_region
      %99 = dma.done [#allocation6], 1024
    $region61: #{tpu_custom_call.1} parent=1 // pred_fallthru
      _
    // Predicated region
    $region62: #{tpu_custom_call.1} parent=1 // pred_check
      _
    $region63: #{tpu_custom_call.1} parent=1 // pred_check_branch
      %101 = sbr.rel (0) target = $region65
    $region64: #{tpu_custom_call.1} parent=1 // pred_region
      %102 = dma.done [#allocation9], 64
    $region65: #{tpu_custom_call.1} parent=1 // pred_fallthru
      _
    // Predicated region
    $region66: #{tpu_custom_call.1} parent=1 // pred_check
      _
    $region67: #{tpu_custom_call.1} parent=1 // pred_check_branch
      %104 = sbr.rel (0) target = $region69
    $region68: #{tpu_custom_call.1} parent=1 // pred_region
      %105 = dma.done [#allocation9], 512
    $region69: #{tpu_custom_call.1} parent=1 // pred_fallthru
      _
    %v107 = vld [vmem:[%s1] sm:$0xf]
    %v108 = vld [vmem:[%s1 + $0x4] sm:$0xf]
    %v109 = vld [vmem:[%s1 + $0x8] sm:$0xf]
    %v110 = vld [vmem:[%s1 + $0xc] sm:$0xf]
    %v111 = vld [vmem:[%s1 + $0x10] sm:$0xf]
    %v112 = vld [vmem:[%s1 + $0x14] sm:$0xf]
    %v113 = vld [vmem:[%s1 + $0x18] sm:$0xf]
    %v114 = vld [vmem:[%s1 + $0x1c] sm:$0xf]
    %v115 = vld [vmem:[#allocation5] sm:$0xff]
    %v116 = vld [vmem:[#allocation2] sm:$0xff]
    %v117 = vpack.c.bf16 %v116, %v116
    %v118 = vld [vmem:[%s3] sm:$0xf]
    %v119 = vld [vmem:[%s3 + $0x4] sm:$0xf]
    %v120 = vld [vmem:[%s3 + $0x8] sm:$0xf]
    %v121 = vld [vmem:[%s3 + $0xc] sm:$0xf]
    %v122 = vld [vmem:[%s3 + $0x10] sm:$0xf]
    %v123 = vld [vmem:[%s3 + $0x14] sm:$0xf]
    %v124 = vld [vmem:[%s3 + $0x18] sm:$0xf]
    %v125 = vld [vmem:[%s3 + $0x1c] sm:$0xf]
    %v126 = vld [vmem:[#allocation8] sm:$0x1]
    %v127 = vld [vmem:[#allocation8 + $0x1] sm:$0x1]
    %v130 = vlaneseq
    %v131 = vshrl.u32 %v130, 7
    %v132 = vsub.s32 0, %v131
    %v133 = vrot.slane %v126, %v132
    %v134 = vlaneseq
    %v135 = vshrl.u32 %v134, 7
    %v136 = vsub.s32 0, %v135
    %v137 = vrot.slane %v127, %v136
    %v144 = vunpack.c.l.b16 %v118
    %v145 = vunpack.c.l.b16 %v119
    %v146 = vunpack.c.l.b16 %v120
    %v147 = vunpack.c.l.b16 %v121
    %v148 = vpack.c.b16 %v145, %v144
    %v149 = vpack.c.b16 %v147, %v146
    %vm152 = vcmask 261120
    %v154 = vsel %vm152, %v117, 0
    %156 = vmatprep.subr.bf16.mxu0 0
    %157 = vmatpush1.bf16.msra.mxu0 %v148
    %158 = vmatprep.subr.bf16.mxu0 0
    %159 = vmatpush1.bf16.msra.mxu0 %v149
    %160 = vmatprep.subr.bf16.mxu0 0
    %161 = vmatpush1.bf16.msra.mxu0 0
    %162 = vmatprep.subr.bf16.mxu0 0
    %163 = vmatpush1.bf16.msra.mxu0 0
    %164 = vmatprep.subr.bf16.mxu0 0
    %165 = vmatpush1.bf16.msra.mxu0 0
    %166 = vmatprep.subr.bf16.mxu0 0
    %167 = vmatpush1.bf16.msra.mxu0 0
    %168 = vmatprep.subr.bf16.mxu0 0
    %169 = vmatpush1.bf16.msra.mxu0 0
    %170 = vmatprep.subr.bf16.mxu0 0
    %171 = vmatpush1.bf16.msra.mxu0 0
    %172 = vmatprep.subr.bf16.mxu0 0
    %173 = vmatpush1.bf16.msra.mxu0 0
    %174 = vmatprep.subr.bf16.mxu0 0
    %175 = vmatpush1.bf16.msra.mxu0 0
    %176 = vmatprep.subr.bf16.mxu0 0
    %177 = vmatpush1.bf16.msra.mxu0 0
    %178 = vmatprep.subr.bf16.mxu0 0
    %179 = vmatpush1.bf16.msra.mxu0 0
    %180 = vmatprep.subr.bf16.mxu0 0
    %181 = vmatpush1.bf16.msra.mxu0 0
    %182 = vmatprep.subr.bf16.mxu0 0
    %183 = vmatpush1.bf16.msra.mxu0 0
    %184 = vmatprep.subr.bf16.mxu0 0
    %185 = vmatpush1.bf16.msra.mxu0 0
    %186 = vmatprep.subr.bf16.mxu0 0
    %187 = vmatpush1.bf16.msra.mxu0 0
    %188 = vmatprep.mubr.bf16.mxu0 0
    %189 = vmatmul.mubr.bf16.gmra.mrb[0].mxu0 %v154
    %v190 = vpop.f32.mrb[0].mxu0
    %v191 = vadd.f32 %v133, %v190
    %v192 = vpop.f32.mrb[0].mxu0
    %v193 = vpop.f32.mrb[0].mxu0
    %v194 = vpop.f32.mrb[0].mxu0
    %195 = vdwg.mxu0
    %v200 = vunpack.c.l.b16 %v122
    %v201 = vunpack.c.l.b16 %v123
    %v202 = vunpack.c.l.b16 %v124
    %v203 = vunpack.c.l.b16 %v125
    %v204 = vpack.c.b16 %v201, %v200
    %v205 = vpack.c.b16 %v203, %v202
    %208 = vmatprep.subr.bf16.mxu0 0
    %209 = vmatpush1.bf16.msra.mxu0 %v204
    %210 = vmatprep.subr.bf16.mxu0 0
    %211 = vmatpush1.bf16.msra.mxu0 %v205
    %212 = vmatprep.subr.bf16.mxu0 0
    %213 = vmatpush1.bf16.msra.mxu0 0
    %214 = vmatprep.subr.bf16.mxu0 0
    %215 = vmatpush1.bf16.msra.mxu0 0
    %216 = vmatprep.subr.bf16.mxu0 0
    %217 = vmatpush1.bf16.msra.mxu0 0
    %218 = vmatprep.subr.bf16.mxu0 0
    %219 = vmatpush1.bf16.msra.mxu0 0
    %220 = vmatprep.subr.bf16.mxu0 0
    %221 = vmatpush1.bf16.msra.mxu0 0
    %222 = vmatprep.subr.bf16.mxu0 0
    %223 = vmatpush1.bf16.msra.mxu0 0
    %224 = vmatprep.subr.bf16.mxu0 0
    %225 = vmatpush1.bf16.msra.mxu0 0
    %226 = vmatprep.subr.bf16.mxu0 0
    %227 = vmatpush1.bf16.msra.mxu0 0
    %228 = vmatprep.subr.bf16.mxu0 0
    %229 = vmatpush1.bf16.msra.mxu0 0
    %230 = vmatprep.subr.bf16.mxu0 0
    %231 = vmatpush1.bf16.msra.mxu0 0
    %232 = vmatprep.subr.bf16.mxu0 0
    %233 = vmatpush1.bf16.msra.mxu0 0
    %234 = vmatprep.subr.bf16.mxu0 0
    %235 = vmatpush1.bf16.msra.mxu0 0
    %236 = vmatprep.subr.bf16.mxu0 0
    %237 = vmatpush1.bf16.msra.mxu0 0
    %238 = vmatprep.subr.bf16.mxu0 0
    %239 = vmatpush1.bf16.msra.mxu0 0
    %240 = vmatprep.mubr.bf16.mxu0 0
    %241 = vmatmul.mubr.bf16.gmra.mrb[0].mxu0 %v154
    %v242 = vpop.f32.mrb[0].mxu0
    %v243 = vadd.f32 %v137, %v242
    %v244 = vpop.f32.mrb[0].mxu0
    %v245 = vpop.f32.mrb[0].mxu0
    %v246 = vpop.f32.mrb[0].mxu0
    %247 = vdwg.mxu0
    %v248 = vld [vmem:[#allocation7] sm:$0xf]
    %v249 = vld [vmem:[#allocation7 + $0x4] sm:$0xf]
    %v250 = vld [vmem:[#allocation7 + $0x8] sm:$0xf]
    %v251 = vld [vmem:[#allocation7 + $0xc] sm:$0xf]
    %v252 = vld [vmem:[#allocation7 + $0x10] sm:$0xf]
    %v253 = vld [vmem:[#allocation7 + $0x14] sm:$0xf]
    %v254 = vld [vmem:[#allocation7 + $0x18] sm:$0xf]
    %v255 = vld [vmem:[#allocation7 + $0x1c] sm:$0xf]
    %v260 = vunpack.c.l.b16 %v248
    %v261 = vunpack.c.l.b16 %v249
    %v262 = vunpack.c.l.b16 %v250
    %v263 = vunpack.c.l.b16 %v251
    %v264 = vpack.c.b16 %v261, %v260
    %v265 = vpack.c.b16 %v263, %v262
    %268 = vmatprep.subr.bf16.mxu0 0
    %269 = vmatpush1.bf16.msra.mxu0 %v264
    %270 = vmatprep.subr.bf16.mxu0 0
    %271 = vmatpush1.bf16.msra.mxu0 %v265
    %272 = vmatprep.subr.bf16.mxu0 0
    %273 = vmatpush1.bf16.msra.mxu0 0
    %274 = vmatprep.subr.bf16.mxu0 0
    %275 = vmatpush1.bf16.msra.mxu0 0
    %276 = vmatprep.subr.bf16.mxu0 0
    %277 = vmatpush1.bf16.msra.mxu0 0
    %278 = vmatprep.subr.bf16.mxu0 0
    %279 = vmatpush1.bf16.msra.mxu0 0
    %280 = vmatprep.subr.bf16.mxu0 0
    %281 = vmatpush1.bf16.msra.mxu0 0
    %282 = vmatprep.subr.bf16.mxu0 0
    %283 = vmatpush1.bf16.msra.mxu0 0
    %284 = vmatprep.subr.bf16.mxu0 0
    %285 = vmatpush1.bf16.msra.mxu0 0
    %286 = vmatprep.subr.bf16.mxu0 0
    %287 = vmatpush1.bf16.msra.mxu0 0
    %288 = vmatprep.subr.bf16.mxu0 0
    %289 = vmatpush1.bf16.msra.mxu0 0
    %290 = vmatprep.subr.bf16.mxu0 0
    %291 = vmatpush1.bf16.msra.mxu0 0
    %292 = vmatprep.subr.bf16.mxu0 0
    %293 = vmatpush1.bf16.msra.mxu0 0
    %294 = vmatprep.subr.bf16.mxu0 0
    %295 = vmatpush1.bf16.msra.mxu0 0
    %296 = vmatprep.subr.bf16.mxu0 0
    %297 = vmatpush1.bf16.msra.mxu0 0
    %298 = vmatprep.subr.bf16.mxu0 0
    %299 = vmatpush1.bf16.msra.mxu0 0
    %300 = vmatprep.mubr.bf16.mxu0 0
    %301 = vmatmul.mubr.bf16.gmra.mrb[0].mxu0 %v154
    %v302 = vpop.f32.mrb[0].mxu0
    %v303 = vadd.f32 0.0, %v302
    %v304 = vpop.f32.mrb[0].mxu0
    %v305 = vpop.f32.mrb[0].mxu0
    %v306 = vpop.f32.mrb[0].mxu0
    %307 = vdwg.mxu0
    %v312 = vunpack.c.l.b16 %v252
    %v313 = vunpack.c.l.b16 %v253
    %v314 = vunpack.c.l.b16 %v254
    %v315 = vunpack.c.l.b16 %v255
    %v316 = vpack.c.b16 %v313, %v312
    %v317 = vpack.c.b16 %v315, %v314
    %320 = vmatprep.subr.bf16.mxu0 0
    %321 = vmatpush1.bf16.msra.mxu0 %v316
    %322 = vmatprep.subr.bf16.mxu0 0
    %323 = vmatpush1.bf16.msra.mxu0 %v317
    %324 = vmatprep.subr.bf16.mxu0 0
    %325 = vmatpush1.bf16.msra.mxu0 0
    %326 = vmatprep.subr.bf16.mxu0 0
    %327 = vmatpush1.bf16.msra.mxu0 0
    %328 = vmatprep.subr.bf16.mxu0 0
    %329 = vmatpush1.bf16.msra.mxu0 0
    %330 = vmatprep.subr.bf16.mxu0 0
    %331 = vmatpush1.bf16.msra.mxu0 0
    %332 = vmatprep.subr.bf16.mxu0 0
    %333 = vmatpush1.bf16.msra.mxu0 0
    %334 = vmatprep.subr.bf16.mxu0 0
    %335 = vmatpush1.bf16.msra.mxu0 0
    %336 = vmatprep.subr.bf16.mxu0 0
    %337 = vmatpush1.bf16.msra.mxu0 0
    %338 = vmatprep.subr.bf16.mxu0 0
    %339 = vmatpush1.bf16.msra.mxu0 0
    %340 = vmatprep.subr.bf16.mxu0 0
    %341 = vmatpush1.bf16.msra.mxu0 0
    %342 = vmatprep.subr.bf16.mxu0 0
    %343 = vmatpush1.bf16.msra.mxu0 0
    %344 = vmatprep.subr.bf16.mxu0 0
    %345 = vmatpush1.bf16.msra.mxu0 0
    %346 = vmatprep.subr.bf16.mxu0 0
    %347 = vmatpush1.bf16.msra.mxu0 0
    %348 = vmatprep.subr.bf16.mxu0 0
    %349 = vmatpush1.bf16.msra.mxu0 0
    %350 = vmatprep.subr.bf16.mxu0 0
    %351 = vmatpush1.bf16.msra.mxu0 0
    %352 = vmatprep.mubr.bf16.mxu0 0
    %353 = vmatmul.mubr.bf16.gmra.mrb[0].mxu0 %v154
    %v354 = vpop.f32.mrb[0].mxu0
    %v355 = vadd.f32 0.0, %v354
    %v356 = vpop.f32.mrb[0].mxu0
    %v357 = vpop.f32.mrb[0].mxu0
    %v358 = vpop.f32.mrb[0].mxu0
    %359 = vdwg.mxu0
    %v360 = vld [vmem:[%s6] sm:$0xf]
    %v361 = vld [vmem:[%s6 + $0x4] sm:$0xf]
    %v362 = vld [vmem:[%s6 + $0x8] sm:$0xf]
    %v363 = vld [vmem:[%s6 + $0xc] sm:$0xf]
    %v364 = vld [vmem:[%s6 + $0x10] sm:$0xf]
    %v365 = vld [vmem:[%s6 + $0x14] sm:$0xf]
    %v366 = vld [vmem:[%s6 + $0x18] sm:$0xf]
    %v367 = vld [vmem:[%s6 + $0x1c] sm:$0xf]
    %v372 = vunpack.c.l.b16 %v360
    %v373 = vunpack.c.l.b16 %v361
    %v374 = vunpack.c.l.b16 %v362
    %v375 = vunpack.c.l.b16 %v363
    %v376 = vpack.c.b16 %v373, %v372
    %v377 = vpack.c.b16 %v375, %v374
    %380 = vmatprep.subr.bf16.mxu0 0
    %381 = vmatpush1.bf16.msra.mxu0 %v376
    %382 = vmatprep.subr.bf16.mxu0 0
    %383 = vmatpush1.bf16.msra.mxu0 %v377
    %384 = vmatprep.subr.bf16.mxu0 0
    %385 = vmatpush1.bf16.msra.mxu0 0
    %386 = vmatprep.subr.bf16.mxu0 0
    %387 = vmatpush1.bf16.msra.mxu0 0
    %388 = vmatprep.subr.bf16.mxu0 0
    %389 = vmatpush1.bf16.msra.mxu0 0
    %390 = vmatprep.subr.bf16.mxu0 0
    %391 = vmatpush1.bf16.msra.mxu0 0
    %392 = vmatprep.subr.bf16.mxu0 0
    %393 = vmatpush1.bf16.msra.mxu0 0
    %394 = vmatprep.subr.bf16.mxu0 0
    %395 = vmatpush1.bf16.msra.mxu0 0
    %396 = vmatprep.subr.bf16.mxu0 0
    %397 = vmatpush1.bf16.msra.mxu0 0
    %398 = vmatprep.subr.bf16.mxu0 0
    %399 = vmatpush1.bf16.msra.mxu0 0
    %400 = vmatprep.subr.bf16.mxu0 0
    %401 = vmatpush1.bf16.msra.mxu0 0
    %402 = vmatprep.subr.bf16.mxu0 0
    %403 = vmatpush1.bf16.msra.mxu0 0
    %404 = vmatprep.subr.bf16.mxu0 0
    %405 = vmatpush1.bf16.msra.mxu0 0
    %406 = vmatprep.subr.bf16.mxu0 0
    %407 = vmatpush1.bf16.msra.mxu0 0
    %408 = vmatprep.subr.bf16.mxu0 0
    %409 = vmatpush1.bf16.msra.mxu0 0
    %410 = vmatprep.subr.bf16.mxu0 0
    %411 = vmatpush1.bf16.msra.mxu0 0
    %412 = vmatprep.mubr.bf16.mxu0 0
    %413 = vmatmul.mubr.bf16.gmra.mrb[0].mxu0 %v154
    %v414 = vpop.f32.mrb[0].mxu0
    %v415 = vadd.f32 0.0, %v414
    %v416 = vpop.f32.mrb[0].mxu0
    %v417 = vpop.f32.mrb[0].mxu0
    %v418 = vpop.f32.mrb[0].mxu0
    %419 = vdwg.mxu0
    %v424 = vunpack.c.l.b16 %v364
    %v425 = vunpack.c.l.b16 %v365
    %v426 = vunpack.c.l.b16 %v366
    %v427 = vunpack.c.l.b16 %v367
    %v428 = vpack.c.b16 %v425, %v424
    %v429 = vpack.c.b16 %v427, %v426
    %432 = vmatprep.subr.bf16.mxu0 0
    %433 = vmatpush1.bf16.msra.mxu0 %v428
    %434 = vmatprep.subr.bf16.mxu0 0
    %435 = vmatpush1.bf16.msra.mxu0 %v429
    %436 = vmatprep.subr.bf16.mxu0 0
    %437 = vmatpush1.bf16.msra.mxu0 0
    %438 = vmatprep.subr.bf16.mxu0 0
    %439 = vmatpush1.bf16.msra.mxu0 0
    %440 = vmatprep.subr.bf16.mxu0 0
    %441 = vmatpush1.bf16.msra.mxu0 0
    %442 = vmatprep.subr.bf16.mxu0 0
    %443 = vmatpush1.bf16.msra.mxu0 0
    %444 = vmatprep.subr.bf16.mxu0 0
    %445 = vmatpush1.bf16.msra.mxu0 0
    %446 = vmatprep.subr.bf16.mxu0 0
    %447 = vmatpush1.bf16.msra.mxu0 0
    %448 = vmatprep.subr.bf16.mxu0 0
    %449 = vmatpush1.bf16.msra.mxu0 0
    %450 = vmatprep.subr.bf16.mxu0 0
    %451 = vmatpush1.bf16.msra.mxu0 0
    %452 = vmatprep.subr.bf16.mxu0 0
    %453 = vmatpush1.bf16.msra.mxu0 0
    %454 = vmatprep.subr.bf16.mxu0 0
    %455 = vmatpush1.bf16.msra.mxu0 0
    %456 = vmatprep.subr.bf16.mxu0 0
    %457 = vmatpush1.bf16.msra.mxu0 0
    %458 = vmatprep.subr.bf16.mxu0 0
    %459 = vmatpush1.bf16.msra.mxu0 0
    %460 = vmatprep.subr.bf16.mxu0 0
    %461 = vmatpush1.bf16.msra.mxu0 0
    %462 = vmatprep.subr.bf16.mxu0 0
    %463 = vmatpush1.bf16.msra.mxu0 0
    %464 = vmatprep.mubr.bf16.mxu0 0
    %465 = vmatmul.mubr.bf16.gmra.mrb[0].mxu0 %v154
    %v466 = vpop.f32.mrb[0].mxu0
    %v467 = vadd.f32 0.0, %v466
    %v468 = vpop.f32.mrb[0].mxu0
    %v469 = vpop.f32.mrb[0].mxu0
    %v470 = vpop.f32.mrb[0].mxu0
    %471 = vdwg.mxu0
    %v472 = vpack.c.bf16 %v303, %v303
    %v473 = vpack.c.bf16 %v355, %v355
    %v482 = vunpack.c.l.b16 %v107
    %v483 = vunpack.c.l.b16 %v108
    %v484 = vunpack.c.l.b16 %v109
    %v485 = vunpack.c.l.b16 %v110
    %v486 = vunpack.c.l.b16 %v111
    %v487 = vunpack.c.l.b16 %v112
    %v488 = vunpack.c.l.b16 %v113
    %v489 = vunpack.c.l.b16 %v114
    %v490 = vpack.c.b16 %v483, %v482
    %v491 = vpack.c.b16 %v485, %v484
    %v492 = vpack.c.b16 %v487, %v486
    %v493 = vpack.c.b16 %v489, %v488
    %vm494 = vcmask 64512
    %v496 = vsel %vm494, %v490, 0
    %v499 = vsel %vm494, %v491, 0
    %v502 = vsel %vm494, %v492, 0
    %v505 = vsel %vm494, %v493, 0
    %vm507 = vcmask 1043456
    %v509 = vsel %vm507, %v472, 0
    %511 = vmatprep.subr.bf16.mxu0 0
    %512 = vmatpush1.bf16.msra.mxu0 %v509
    %513 = vmatprep.subr.bf16.mxu0 0
    %514 = vmatpush1.bf16.msra.mxu0 0
    %515 = vmatprep.subr.bf16.mxu0 0
    %516 = vmatpush1.bf16.msra.mxu0 0
    %517 = vmatprep.subr.bf16.mxu0 0
    %518 = vmatpush1.bf16.msra.mxu0 0
    %519 = vmatprep.subr.bf16.mxu0 0
    %520 = vmatpush1.bf16.msra.mxu0 0
    %521 = vmatprep.subr.bf16.mxu0 0
    %522 = vmatpush1.bf16.msra.mxu0 0
    %523 = vmatprep.subr.bf16.mxu0 0
    %524 = vmatpush1.bf16.msra.mxu0 0
    %525 = vmatprep.subr.bf16.mxu0 0
    %526 = vmatpush1.bf16.msra.mxu0 0
    %527 = vmatprep.subr.bf16.mxu0 0
    %528 = vmatpush1.bf16.msra.mxu0 0
    %529 = vmatprep.subr.bf16.mxu0 0
    %530 = vmatpush1.bf16.msra.mxu0 0
    %531 = vmatprep.subr.bf16.mxu0 0
    %532 = vmatpush1.bf16.msra.mxu0 0
    %533 = vmatprep.subr.bf16.mxu0 0
    %534 = vmatpush1.bf16.msra.mxu0 0
    %535 = vmatprep.subr.bf16.mxu0 0
    %536 = vmatpush1.bf16.msra.mxu0 0
    %537 = vmatprep.subr.bf16.mxu0 0
    %538 = vmatpush1.bf16.msra.mxu0 0
    %539 = vmatprep.subr.bf16.mxu0 0
    %540 = vmatpush1.bf16.msra.mxu0 0
    %541 = vmatprep.subr.bf16.mxu0 0
    %542 = vmatpush1.bf16.msra.mxu0 0
    %543 = vmatprep.mubr.bf16.mxu0 0
    %544 = vmatmul.mubr.bf16.gmra.mrb[0].mxu0 %v496
    %v545 = vpop.f32.mrb[0].mxu0
    %v546 = vadd.f32 0.0, %v545
    %v547 = vpop.f32.mrb[0].mxu0
    %v548 = vpop.f32.mrb[0].mxu0
    %v549 = vadd.f32 0.0, %v548
    %v550 = vpop.f32.mrb[0].mxu0
    %551 = vmatprep.mubr.bf16.mxu0 0
    %552 = vmatmul.mubr.bf16.gmra.mrb[0].mxu0 %v499
    %v553 = vpop.f32.mrb[0].mxu0
    %v554 = vadd.f32 0.0, %v553
    %v555 = vpop.f32.mrb[0].mxu0
    %v556 = vpop.f32.mrb[0].mxu0
    %v557 = vadd.f32 0.0, %v556
    %v558 = vpop.f32.mrb[0].mxu0
    %559 = vmatprep.mubr.bf16.mxu0 0
    %560 = vmatmul.mubr.bf16.gmra.mrb[0].mxu0 %v502
    %v561 = vpop.f32.mrb[0].mxu0
    %v562 = vadd.f32 0.0, %v561
    %v563 = vpop.f32.mrb[0].mxu0
    %v564 = vpop.f32.mrb[0].mxu0
    %v565 = vadd.f32 0.0, %v564
    %v566 = vpop.f32.mrb[0].mxu0
    %567 = vmatprep.mubr.bf16.mxu0 0
    %568 = vmatmul.mubr.bf16.gmra.mrb[0].mxu0 %v505
    %v569 = vpop.f32.mrb[0].mxu0
    %v570 = vadd.f32 0.0, %v569
    %v571 = vpop.f32.mrb[0].mxu0
    %v572 = vpop.f32.mrb[0].mxu0
    %v573 = vadd.f32 0.0, %v572
    %v574 = vpop.f32.mrb[0].mxu0
    %575 = vdwg.mxu0
    %v577 = vsel %vm507, %v473, 0
    %579 = vmatprep.subr.bf16.mxu0 0
    %580 = vmatpush1.bf16.msra.mxu0 %v577
    %581 = vmatprep.subr.bf16.mxu0 0
    %582 = vmatpush1.bf16.msra.mxu0 0
    %583 = vmatprep.subr.bf16.mxu0 0
    %584 = vmatpush1.bf16.msra.mxu0 0
    %585 = vmatprep.subr.bf16.mxu0 0
    %586 = vmatpush1.bf16.msra.mxu0 0
    %587 = vmatprep.subr.bf16.mxu0 0
    %588 = vmatpush1.bf16.msra.mxu0 0
    %589 = vmatprep.subr.bf16.mxu0 0
    %590 = vmatpush1.bf16.msra.mxu0 0
    %591 = vmatprep.subr.bf16.mxu0 0
    %592 = vmatpush1.bf16.msra.mxu0 0
    %593 = vmatprep.subr.bf16.mxu0 0
    %594 = vmatpush1.bf16.msra.mxu0 0
    %595 = vmatprep.subr.bf16.mxu0 0
    %596 = vmatpush1.bf16.msra.mxu0 0
    %597 = vmatprep.subr.bf16.mxu0 0
    %598 = vmatpush1.bf16.msra.mxu0 0
    %599 = vmatprep.subr.bf16.mxu0 0
    %600 = vmatpush1.bf16.msra.mxu0 0
    %601 = vmatprep.subr.bf16.mxu0 0
    %602 = vmatpush1.bf16.msra.mxu0 0
    %603 = vmatprep.subr.bf16.mxu0 0
    %604 = vmatpush1.bf16.msra.mxu0 0
    %605 = vmatprep.subr.bf16.mxu0 0
    %606 = vmatpush1.bf16.msra.mxu0 0
    %607 = vmatprep.subr.bf16.mxu0 0
    %608 = vmatpush1.bf16.msra.mxu0 0
    %609 = vmatprep.subr.bf16.mxu0 0
    %610 = vmatpush1.bf16.msra.mxu0 0
    %611 = vmatprep.mubr.bf16.mxu0 0
    %612 = vmatmul.mubr.bf16.gmra.mrb[0].mxu0 %v496
    %v613 = vpop.f32.mrb[0].mxu0
    %v614 = vadd.f32 0.0, %v613
    %v615 = vpop.f32.mrb[0].mxu0
    %v616 = vpop.f32.mrb[0].mxu0
    %v617 = vadd.f32 0.0, %v616
    %v618 = vpop.f32.mrb[0].mxu0
    %619 = vmatprep.mubr.bf16.mxu0 0
    %620 = vmatmul.mubr.bf16.gmra.mrb[0].mxu0 %v499
    %v621 = vpop.f32.mrb[0].mxu0
    %v622 = vadd.f32 0.0, %v621
    %v623 = vpop.f32.mrb[0].mxu0
    %v624 = vpop.f32.mrb[0].mxu0
    %v625 = vadd.f32 0.0, %v624
    %v626 = vpop.f32.mrb[0].mxu0
    %627 = vmatprep.mubr.bf16.mxu0 0
    %628 = vmatmul.mubr.bf16.gmra.mrb[0].mxu0 %v502
    %v629 = vpop.f32.mrb[0].mxu0
    %v630 = vadd.f32 0.0, %v629
    %v631 = vpop.f32.mrb[0].mxu0
    %v632 = vpop.f32.mrb[0].mxu0
    %v633 = vadd.f32 0.0, %v632
    %v634 = vpop.f32.mrb[0].mxu0
    %635 = vmatprep.mubr.bf16.mxu0 0
    %636 = vmatmul.mubr.bf16.gmra.mrb[0].mxu0 %v505
    %v637 = vpop.f32.mrb[0].mxu0
    %v638 = vadd.f32 0.0, %v637
    %v639 = vpop.f32.mrb[0].mxu0
    %v640 = vpop.f32.mrb[0].mxu0
    %v641 = vadd.f32 0.0, %v640
    %v642 = vpop.f32.mrb[0].mxu0
    %643 = vdwg.mxu0
    %v644 = vadd.f32 %v546, %v191
    %v645 = vadd.f32 %v549, %v191
    %v646 = vadd.f32 %v554, %v191
    %v647 = vadd.f32 %v557, %v191
    %v648 = vadd.f32 %v562, %v191
    %v649 = vadd.f32 %v565, %v191
    %v650 = vadd.f32 %v570, %v191
    %v651 = vadd.f32 %v573, %v191
    %v652 = vadd.f32 %v614, %v243
    %v653 = vadd.f32 %v617, %v243
    %v654 = vadd.f32 %v622, %v243
    %v655 = vadd.f32 %v625, %v243
    %v656 = vadd.f32 %v630, %v243
    %v657 = vadd.f32 %v633, %v243
    %v658 = vadd.f32 %v638, %v243
    %v659 = vadd.f32 %v641, %v243
    %vm660 = vcmp.gt.f32.partialorder %v644, 0.0
    %vm661 = vcmp.gt.f32.partialorder %v645, 0.0
    %vm662 = vcmp.gt.f32.partialorder %v646, 0.0
    %vm663 = vcmp.gt.f32.partialorder %v647, 0.0
    %vm664 = vcmp.gt.f32.partialorder %v648, 0.0
    %vm665 = vcmp.gt.f32.partialorder %v649, 0.0
    %vm666 = vcmp.gt.f32.partialorder %v650, 0.0
    %vm667 = vcmp.gt.f32.partialorder %v651, 0.0
    %vm668 = vcmp.gt.f32.partialorder %v652, 0.0
    %vm669 = vcmp.gt.f32.partialorder %v653, 0.0
    %vm670 = vcmp.gt.f32.partialorder %v654, 0.0
    %vm671 = vcmp.gt.f32.partialorder %v655, 0.0
    %vm672 = vcmp.gt.f32.partialorder %v656, 0.0
    %vm673 = vcmp.gt.f32.partialorder %v657, 0.0
    %vm674 = vcmp.gt.f32.partialorder %v658, 0.0
    %vm675 = vcmp.gt.f32.partialorder %v659, 0.0
    %v676 = vmul.f32 %v644, 0.2
    %v677 = vmul.f32 %v645, 0.2
    %v678 = vmul.f32 %v646, 0.2
    %v679 = vmul.f32 %v647, 0.2
    %v680 = vmul.f32 %v648, 0.2
    %v681 = vmul.f32 %v649, 0.2
    %v682 = vmul.f32 %v650, 0.2
    %v683 = vmul.f32 %v651, 0.2
    %v684 = vmul.f32 %v652, 0.2
    %v685 = vmul.f32 %v653, 0.2
    %v686 = vmul.f32 %v654, 0.2
    %v687 = vmul.f32 %v655, 0.2
    %v688 = vmul.f32 %v656, 0.2
    %v689 = vmul.f32 %v657, 0.2
    %v690 = vmul.f32 %v658, 0.2
    %v691 = vmul.f32 %v659, 0.2
    %v692 = vsel %vm660, %v644, %v676
    %v693 = vsel %vm661, %v645, %v677
    %v694 = vsel %vm662, %v646, %v678
    %v695 = vsel %vm663, %v647, %v679
    %v696 = vsel %vm664, %v648, %v680
    %v697 = vsel %vm665, %v649, %v681
    %v698 = vsel %vm666, %v650, %v682
    %v699 = vsel %vm667, %v651, %v683
    %v700 = vsel %vm668, %v652, %v684
    %v701 = vsel %vm669, %v653, %v685
    %v702 = vsel %vm670, %v654, %v686
    %v703 = vsel %vm671, %v655, %v687
    %v704 = vsel %vm672, %v656, %v688
    %v705 = vsel %vm673, %v657, %v689
    %v706 = vsel %vm674, %v658, %v690
    %v707 = vsel %vm675, %v659, %v691
    %v708 = vld [vmem:[%s7] sm:$0x1]
    %v709 = vld [vmem:[%s7 + $0x1] sm:$0x1]
    %v712 = vlaneseq
    %v713 = vshrl.u32 %v712, 7
    %v714 = vsub.s32 0, %v713
    %v715 = vrot.slane %v708, %v714
    %v716 = vlaneseq
    %v717 = vshrl.u32 %v716, 7
    %v718 = vsub.s32 0, %v717
    %v719 = vrot.slane %v709, %v718
    %v722 = vmul.f32 %v692, %v715
    %v723 = vmul.f32 %v693, %v715
    %v724 = vmul.f32 %v694, %v715
    %v725 = vmul.f32 %v695, %v715
    %v726 = vmul.f32 %v696, %v715
    %v727 = vmul.f32 %v697, %v715
    %v728 = vmul.f32 %v698, %v715
    %v729 = vmul.f32 %v699, %v715
    %v730 = vmul.f32 %v700, %v719
    %v731 = vmul.f32 %v701, %v719
    %v732 = vmul.f32 %v702, %v719
    %v733 = vmul.f32 %v703, %v719
    %v734 = vmul.f32 %v704, %v719
    %v735 = vmul.f32 %v705, %v719
    %v736 = vmul.f32 %v706, %v719
    %v737 = vmul.f32 %v707, %v719
    %v738 = vsel %vm152, %v722, 0.0
    %739 = vadd.xlane.f32.xlu0 %v738
    %v740 = vpop.xlane.xlu0 %739
    %v741 = vsel %vm152, %v723, 0.0
    %742 = vadd.xlane.f32.xlu0 %v741
    %v743 = vpop.xlane.xlu0 %742
    %v744 = vsel %vm152, %v724, 0.0
    %745 = vadd.xlane.f32.xlu0 %v744
    %v746 = vpop.xlane.xlu0 %745
    %v747 = vsel %vm152, %v725, 0.0
    %748 = vadd.xlane.f32.xlu0 %v747
    %v749 = vpop.xlane.xlu0 %748
    %v750 = vsel %vm152, %v726, 0.0
    %751 = vadd.xlane.f32.xlu0 %v750
    %v752 = vpop.xlane.xlu0 %751
    %v753 = vsel %vm152, %v727, 0.0
    %754 = vadd.xlane.f32.xlu0 %v753
    %v755 = vpop.xlane.xlu0 %754
    %v756 = vsel %vm152, %v728, 0.0
    %757 = vadd.xlane.f32.xlu0 %v756
    %v758 = vpop.xlane.xlu0 %757
    %v759 = vsel %vm152, %v729, 0.0
    %760 = vadd.xlane.f32.xlu0 %v759
    %v761 = vpop.xlane.xlu0 %760
    %v762 = vsel %vm152, %v730, 0.0
    %763 = vadd.xlane.f32.xlu0 %v762
    %v764 = vpop.xlane.xlu0 %763
    %v765 = vsel %vm152, %v731, 0.0
    %766 = vadd.xlane.f32.xlu0 %v765
    %v767 = vpop.xlane.xlu0 %766
    %v768 = vsel %vm152, %v732, 0.0
    %769 = vadd.xlane.f32.xlu0 %v768
    %v770 = vpop.xlane.xlu0 %769
    %v771 = vsel %vm152, %v733, 0.0
    %772 = vadd.xlane.f32.xlu0 %v771
    %v773 = vpop.xlane.xlu0 %772
    %v774 = vsel %vm152, %v734, 0.0
    %775 = vadd.xlane.f32.xlu0 %v774
    %v776 = vpop.xlane.xlu0 %775
    %v777 = vsel %vm152, %v735, 0.0
    %778 = vadd.xlane.f32.xlu0 %v777
    %v779 = vpop.xlane.xlu0 %778
    %v780 = vsel %vm152, %v736, 0.0
    %781 = vadd.xlane.f32.xlu0 %v780
    %v782 = vpop.xlane.xlu0 %781
    %v783 = vsel %vm152, %v737, 0.0
    %784 = vadd.xlane.f32.xlu0 %v783
    %v785 = vpop.xlane.xlu0 %784
    %787 = vset.pattern.permute.xlu0 0
    %788 = vperm.xlu0 %787, %v415
    %v789 = vpop.permute.xlu0 %788
    %792 = vset.pattern.permute.xlu0 0
    %793 = vperm.xlu0 %792, %v467
    %v794 = vpop.permute.xlu0 %793
    %v812 = vlaneseq
    %v813 = vand.u32 %v812, 127
    %v814 = vlaneseq
    %v815 = vshrl.u32 %v814, 7
    %v816 = vsub.s32 %v813, %v815
    %v817 = vrot.slane %v740, %v816
    %v818 = vlaneseq
    %v819 = vshrl.u32 %v818, 7
    %v820 = vsub.s32 %v813, %v819
    %v821 = vrot.slane %v743, %v820
    %v822 = vlaneseq
    %v823 = vshrl.u32 %v822, 7
    %v824 = vsub.s32 %v813, %v823
    %v825 = vrot.slane %v746, %v824
    %v826 = vlaneseq
    %v827 = vshrl.u32 %v826, 7
    %v828 = vsub.s32 %v813, %v827
    %v829 = vrot.slane %v749, %v828
    %v830 = vlaneseq
    %v831 = vshrl.u32 %v830, 7
    %v832 = vsub.s32 %v813, %v831
    %v833 = vrot.slane %v752, %v832
    %v834 = vlaneseq
    %v835 = vshrl.u32 %v834, 7
    %v836 = vsub.s32 %v813, %v835
    %v837 = vrot.slane %v755, %v836
    %v838 = vlaneseq
    %v839 = vshrl.u32 %v838, 7
    %v840 = vsub.s32 %v813, %v839
    %v841 = vrot.slane %v758, %v840
    %v842 = vlaneseq
    %v843 = vshrl.u32 %v842, 7
    %v844 = vsub.s32 %v813, %v843
    %v845 = vrot.slane %v761, %v844
    %v846 = vlaneseq
    %v847 = vshrl.u32 %v846, 7
    %v848 = vsub.s32 %v813, %v847
    %v849 = vrot.slane %v764, %v848
    %v850 = vlaneseq
    %v851 = vshrl.u32 %v850, 7
    %v852 = vsub.s32 %v813, %v851
    %v853 = vrot.slane %v767, %v852
    %v854 = vlaneseq
    %v855 = vshrl.u32 %v854, 7
    %v856 = vsub.s32 %v813, %v855
    %v857 = vrot.slane %v770, %v856
    %v858 = vlaneseq
    %v859 = vshrl.u32 %v858, 7
    %v860 = vsub.s32 %v813, %v859
    %v861 = vrot.slane %v773, %v860
    %v862 = vlaneseq
    %v863 = vshrl.u32 %v862, 7
    %v864 = vsub.s32 %v813, %v863
    %v865 = vrot.slane %v776, %v864
    %v866 = vlaneseq
    %v867 = vshrl.u32 %v866, 7
    %v868 = vsub.s32 %v813, %v867
    %v869 = vrot.slane %v779, %v868
    %v870 = vlaneseq
    %v871 = vshrl.u32 %v870, 7
    %v872 = vsub.s32 %v813, %v871
    %v873 = vrot.slane %v782, %v872
    %v874 = vlaneseq
    %v875 = vshrl.u32 %v874, 7
    %v876 = vsub.s32 %v813, %v875
    %v877 = vrot.slane %v785, %v876
    %vm878 = vcmask 1041409
    %v879 = vsel %vm878, %v821, %v817
    %vm880 = vcmask 1042434
    %v881 = vsel %vm880, %v825, %v879
    %vm882 = vcmask 1043459
    %v883 = vsel %vm882, %v829, %v881
    %vm884 = vcmask 1044484
    %v885 = vsel %vm884, %v833, %v883
    %vm886 = vcmask 1045509
    %v887 = vsel %vm886, %v837, %v885
    %vm888 = vcmask 1046534
    %v889 = vsel %vm888, %v841, %v887
    %vm890 = vcmask 1047559
    %v891 = vsel %vm890, %v845, %v889
    %v892 = vsel %vm878, %v853, %v849
    %v893 = vsel %vm880, %v857, %v892
    %v894 = vsel %vm882, %v861, %v893
    %v895 = vsel %vm884, %v865, %v894
    %v896 = vsel %vm886, %v869, %v895
    %v897 = vsel %vm888, %v873, %v896
    %v898 = vsel %vm890, %v877, %v897
    %v901 = vadd.f32 %v789, %v891
    %v902 = vadd.f32 %v794, %v898
    %v903 = vld [vmem:[%s8] sm:$0x1]
    %v904 = vld [vmem:[%s8 + $0x1] sm:$0x1]
    %v907 = vlaneseq
    %v908 = vshrl.u32 %v907, 7
    %v909 = vsub.s32 0, %v908
    %v910 = vrot.slane %v903, %v909
    %v911 = vlaneseq
    %v912 = vshrl.u32 %v911, 7
    %v913 = vsub.s32 0, %v912
    %v914 = vrot.slane %v904, %v913
    %915 = vset.pattern.permute.xlu0 0
    %916 = vperm.xlu0 %915, %v910
    %v917 = vpop.permute.xlu0 %916
    %919 = vset.pattern.permute.xlu0 0
    %920 = vperm.xlu0 %919, %v914
    %v921 = vpop.permute.xlu0 %920
    %v923 = vadd.f32 %v901, %v917
    %v924 = vadd.f32 %v902, %v921
    %vm925 = vcmp.gt.f32.partialorder %v923, 0.0
    %vm926 = vcmp.gt.f32.partialorder %v924, 0.0
    %v927 = vmul.f32 %v923, 0.2
    %v928 = vmul.f32 %v924, 0.2
    %v929 = vsel %vm925, %v923, %v927
    %v930 = vsel %vm926, %v924, %v928
    %v931 = vadd.f32 %v929, %v115
    %v932 = vadd.f32 %v930, %v115
    %v933 = vsel %vm494, %v931, -inf
    %934 = vmax.xlane.f32.xlu0 %v933
    %v935 = vpop.xlane.xlu0 %934
    %v936 = vsel %vm494, %v932, -inf
    %937 = vmax.xlane.f32.xlu0 %v936
    %v938 = vpop.xlane.xlu0 %937
    %v939 = vsub.f32 %v931, %v935
    %v940 = vsub.f32 %v932, %v938
    %v941 = vmul.f32 %v939, 1.442695
    %v942 = vpow.pop %v941
    %v943 = vmul.f32 %v940, 1.442695
    %v944 = vpow.pop %v943
    %v945 = vsel %vm494, %v942, 0.0
    %946 = vadd.xlane.f32.xlu0 %v945
    %v947 = vpop.xlane.xlu0 %946
    %v948 = vsel %vm494, %v944, 0.0
    %949 = vadd.xlane.f32.xlu0 %v948
    %v950 = vpop.xlane.xlu0 %949
    %v951 = vrcp.pop %v947
    %v952 = vrcp.pop %v950
    %v953 = vmul.f32 %v942, %v951
    %v954 = vmul.f32 %v944, %v952
    %v955 = vpack.c.bf16 %v953, %v953
    %v956 = vpack.c.bf16 %v954, %v954
    %v958 = vsel %vm494, %v955, 0
    %v960 = vsel %vm507, %v117, 0
    %962 = vmatprep.subr.bf16.mxu0 0
    %963 = vmatpush1.bf16.msra.mxu0 %v960
    %964 = vmatprep.subr.bf16.mxu0 0
    %965 = vmatpush1.bf16.msra.mxu0 0
    %966 = vmatprep.subr.bf16.mxu0 0
    %967 = vmatpush1.bf16.msra.mxu0 0
    %968 = vmatprep.subr.bf16.mxu0 0
    %969 = vmatpush1.bf16.msra.mxu0 0
    %970 = vmatprep.subr.bf16.mxu0 0
    %971 = vmatpush1.bf16.msra.mxu0 0
    %972 = vmatprep.subr.bf16.mxu0 0
    %973 = vmatpush1.bf16.msra.mxu0 0
    %974 = vmatprep.subr.bf16.mxu0 0
    %975 = vmatpush1.bf16.msra.mxu0 0
    %976 = vmatprep.subr.bf16.mxu0 0
    %977 = vmatpush1.bf16.msra.mxu0 0
    %978 = vmatprep.subr.bf16.mxu0 0
    %979 = vmatpush1.bf16.msra.mxu0 0
    %980 = vmatprep.subr.bf16.mxu0 0
    %981 = vmatpush1.bf16.msra.mxu0 0
    %982 = vmatprep.subr.bf16.mxu0 0
    %983 = vmatpush1.bf16.msra.mxu0 0
    %984 = vmatprep.subr.bf16.mxu0 0
    %985 = vmatpush1.bf16.msra.mxu0 0
    %986 = vmatprep.subr.bf16.mxu0 0
    %987 = vmatpush1.bf16.msra.mxu0 0
    %988 = vmatprep.subr.bf16.mxu0 0
    %989 = vmatpush1.bf16.msra.mxu0 0
    %990 = vmatprep.subr.bf16.mxu0 0
    %991 = vmatpush1.bf16.msra.mxu0 0
    %992 = vmatprep.subr.bf16.mxu0 0
    %993 = vmatpush1.bf16.msra.mxu0 0
    %994 = vmatprep.mubr.bf16.mxu0 0
    %995 = vmatmul.mubr.bf16.gmra.mrb[0].mxu0 %v958
    %v996 = vpop.f32.mrb[0].mxu0
    %v997 = vadd.f32 0.0, %v996
    %v998 = vpop.f32.mrb[0].mxu0
    %v999 = vpop.f32.mrb[0].mxu0
    %v1000 = vpop.f32.mrb[0].mxu0
    %1001 = vdwg.mxu0
    %v1003 = vsel %vm494, %v956, 0
    %1005 = vmatprep.subr.bf16.mxu0 0
    %1006 = vmatpush1.bf16.msra.mxu0 %v960
    %1007 = vmatprep.subr.bf16.mxu0 0
    %1008 = vmatpush1.bf16.msra.mxu0 0
    %1009 = vmatprep.subr.bf16.mxu0 0
    %1010 = vmatpush1.bf16.msra.mxu0 0
    %1011 = vmatprep.subr.bf16.mxu0 0
    %1012 = vmatpush1.bf16.msra.mxu0 0
    %1013 = vmatprep.subr.bf16.mxu0 0
    %1014 = vmatpush1.bf16.msra.mxu0 0
    %1015 = vmatprep.subr.bf16.mxu0 0
    %1016 = vmatpush1.bf16.msra.mxu0 0
    %1017 = vmatprep.subr.bf16.mxu0 0
    %1018 = vmatpush1.bf16.msra.mxu0 0
    %1019 = vmatprep.subr.bf16.mxu0 0
    %1020 = vmatpush1.bf16.msra.mxu0 0
    %1021 = vmatprep.subr.bf16.mxu0 0
    %1022 = vmatpush1.bf16.msra.mxu0 0
    %1023 = vmatprep.subr.bf16.mxu0 0
    %1024 = vmatpush1.bf16.msra.mxu0 0
    %1025 = vmatprep.subr.bf16.mxu0 0
    %1026 = vmatpush1.bf16.msra.mxu0 0
    %1027 = vmatprep.subr.bf16.mxu0 0
    %1028 = vmatpush1.bf16.msra.mxu0 0
    %1029 = vmatprep.subr.bf16.mxu0 0
    %1030 = vmatpush1.bf16.msra.mxu0 0
    %1031 = vmatprep.subr.bf16.mxu0 0
    %1032 = vmatpush1.bf16.msra.mxu0 0
    %1033 = vmatprep.subr.bf16.mxu0 0
    %1034 = vmatpush1.bf16.msra.mxu0 0
    %1035 = vmatprep.subr.bf16.mxu0 0
    %1036 = vmatpush1.bf16.msra.mxu0 0
    %1037 = vmatprep.mubr.bf16.mxu0 0
    %1038 = vmatmul.mubr.bf16.gmra.mrb[0].mxu0 %v1003
    %v1039 = vpop.f32.mrb[0].mxu0
    %v1040 = vadd.f32 0.0, %v1039
    %v1041 = vpop.f32.mrb[0].mxu0
    %v1042 = vpop.f32.mrb[0].mxu0
    %v1043 = vpop.f32.mrb[0].mxu0
    %1044 = vdwg.mxu0
    %v1045 = vld [vmem:[#allocation10] sm:$0xf]
    %v1046 = vld [vmem:[#allocation10 + $0x4] sm:$0xf]
    %v1047 = vld [vmem:[#allocation10 + $0x8] sm:$0xf]
    %v1048 = vld [vmem:[#allocation10 + $0xc] sm:$0xf]
    %v1049 = vld [vmem:[%s11] sm:$0x1]
    %v1051 = vlaneseq
    %v1052 = vshrl.u32 %v1051, 7
    %v1053 = vsub.s32 0, %v1052
    %v1054 = vrot.slane %v1049, %v1053
    %v1060 = vunpack.c.l.b16 %v1045
    %v1061 = vunpack.c.l.b16 %v1046
    %v1062 = vunpack.c.l.b16 %v1047
    %v1063 = vunpack.c.l.b16 %v1048
    %v1064 = vpack.c.b16 %v1061, %v1060
    %v1065 = vpack.c.b16 %v1063, %v1062
    %1068 = vmatprep.subr.bf16.mxu0 0
    %1069 = vmatpush1.bf16.msra.mxu0 %v1064
    %1070 = vmatprep.subr.bf16.mxu0 0
    %1071 = vmatpush1.bf16.msra.mxu0 %v1065
    %1072 = vmatprep.subr.bf16.mxu0 0
    %1073 = vmatpush1.bf16.msra.mxu0 0
    %1074 = vmatprep.subr.bf16.mxu0 0
    %1075 = vmatpush1.bf16.msra.mxu0 0
    %1076 = vmatprep.subr.bf16.mxu0 0
    %1077 = vmatpush1.bf16.msra.mxu0 0
    %1078 = vmatprep.subr.bf16.mxu0 0
    %1079 = vmatpush1.bf16.msra.mxu0 0
    %1080 = vmatprep.subr.bf16.mxu0 0
    %1081 = vmatpush1.bf16.msra.mxu0 0
    %1082 = vmatprep.subr.bf16.mxu0 0
    %1083 = vmatpush1.bf16.msra.mxu0 0
    %1084 = vmatprep.subr.bf16.mxu0 0
    %1085 = vmatpush1.bf16.msra.mxu0 0
    %1086 = vmatprep.subr.bf16.mxu0 0
    %1087 = vmatpush1.bf16.msra.mxu0 0
    %1088 = vmatprep.subr.bf16.mxu0 0
    %1089 = vmatpush1.bf16.msra.mxu0 0
    %1090 = vmatprep.subr.bf16.mxu0 0
    %1091 = vmatpush1.bf16.msra.mxu0 0
    %1092 = vmatprep.subr.bf16.mxu0 0
    %1093 = vmatpush1.bf16.msra.mxu0 0
    %1094 = vmatprep.subr.bf16.mxu0 0
    %1095 = vmatpush1.bf16.msra.mxu0 0
    %1096 = vmatprep.subr.bf16.mxu0 0
    %1097 = vmatpush1.bf16.msra.mxu0 0
    %1098 = vmatprep.subr.bf16.mxu0 0
    %1099 = vmatpush1.bf16.msra.mxu0 0
    %1100 = vmatprep.mubr.bf16.mxu0 0
    %1101 = vmatmul.mubr.bf16.gmra.mrb[0].mxu0 %v154
    %v1102 = vpop.f32.mrb[0].mxu0
    %v1103 = vadd.f32 %v1054, %v1102
    %v1104 = vpop.f32.mrb[0].mxu0
    %v1105 = vpop.f32.mrb[0].mxu0
    %v1106 = vpop.f32.mrb[0].mxu0
    %1107 = vdwg.mxu0
    %v1108 = vld [vmem:[%s10] sm:$0xf]
    %v1109 = vld [vmem:[%s10 + $0x4] sm:$0xf]
    %v1110 = vld [vmem:[%s10 + $0x8] sm:$0xf]
    %v1111 = vld [vmem:[%s10 + $0xc] sm:$0xf]
    %v1112 = vld [vmem:[%s10 + $0x10] sm:$0xf]
    %v1113 = vld [vmem:[%s10 + $0x14] sm:$0xf]
    %v1114 = vld [vmem:[%s10 + $0x18] sm:$0xf]
    %v1115 = vld [vmem:[%s10 + $0x1c] sm:$0xf]
    %v1116 = vpack.c.bf16 %v997, %v997
    %v1117 = vpack.c.bf16 %v1040, %v1040
    %v1122 = vunpack.c.l.b16 %v1108
    %v1123 = vunpack.c.l.b16 %v1109
    %v1124 = vunpack.c.l.b16 %v1110
    %v1125 = vunpack.c.l.b16 %v1111
    %v1126 = vpack.c.b16 %v1123, %v1122
    %v1127 = vpack.c.b16 %v1125, %v1124
    %v1131 = vsel %vm152, %v1116, 0
    %1133 = vmatprep.subr.bf16.mxu0 0
    %1134 = vmatpush1.bf16.msra.mxu0 %v1126
    %1135 = vmatprep.subr.bf16.mxu0 0
    %1136 = vmatpush1.bf16.msra.mxu0 %v1127
    %1137 = vmatprep.subr.bf16.mxu0 0
    %1138 = vmatpush1.bf16.msra.mxu0 0
    %1139 = vmatprep.subr.bf16.mxu0 0
    %1140 = vmatpush1.bf16.msra.mxu0 0
    %1141 = vmatprep.subr.bf16.mxu0 0
    %1142 = vmatpush1.bf16.msra.mxu0 0
    %1143 = vmatprep.subr.bf16.mxu0 0
    %1144 = vmatpush1.bf16.msra.mxu0 0
    %1145 = vmatprep.subr.bf16.mxu0 0
    %1146 = vmatpush1.bf16.msra.mxu0 0
    %1147 = vmatprep.subr.bf16.mxu0 0
    %1148 = vmatpush1.bf16.msra.mxu0 0
    %1149 = vmatprep.subr.bf16.mxu0 0
    %1150 = vmatpush1.bf16.msra.mxu0 0
    %1151 = vmatprep.subr.bf16.mxu0 0
    %1152 = vmatpush1.bf16.msra.mxu0 0
    %1153 = vmatprep.subr.bf16.mxu0 0
    %1154 = vmatpush1.bf16.msra.mxu0 0
    %1155 = vmatprep.subr.bf16.mxu0 0
    %1156 = vmatpush1.bf16.msra.mxu0 0
    %1157 = vmatprep.subr.bf16.mxu0 0
    %1158 = vmatpush1.bf16.msra.mxu0 0
    %1159 = vmatprep.subr.bf16.mxu0 0
    %1160 = vmatpush1.bf16.msra.mxu0 0
    %1161 = vmatprep.subr.bf16.mxu0 0
    %1162 = vmatpush1.bf16.msra.mxu0 0
    %1163 = vmatprep.subr.bf16.mxu0 0
    %1164 = vmatpush1.bf16.msra.mxu0 0
    %1165 = vmatprep.mubr.bf16.mxu0 0
    %1166 = vmatmul.mubr.bf16.gmra.mrb[0].mxu0 %v1131
    %v1167 = vpop.f32.mrb[0].mxu0
    %v1168 = vadd.f32 0.0, %v1167
    %v1169 = vpop.f32.mrb[0].mxu0
    %v1170 = vpop.f32.mrb[0].mxu0
    %v1171 = vpop.f32.mrb[0].mxu0
    %1172 = vdwg.mxu0
    %v1177 = vunpack.c.l.b16 %v1112
    %v1178 = vunpack.c.l.b16 %v1113
    %v1179 = vunpack.c.l.b16 %v1114
    %v1180 = vunpack.c.l.b16 %v1115
    %v1181 = vpack.c.b16 %v1178, %v1177
    %v1182 = vpack.c.b16 %v1180, %v1179
    %v1186 = vsel %vm152, %v1117, 0
    %1188 = vmatprep.subr.bf16.mxu0 0
    %1189 = vmatpush1.bf16.msra.mxu0 %v1181
    %1190 = vmatprep.subr.bf16.mxu0 0
    %1191 = vmatpush1.bf16.msra.mxu0 %v1182
    %1192 = vmatprep.subr.bf16.mxu0 0
    %1193 = vmatpush1.bf16.msra.mxu0 0
    %1194 = vmatprep.subr.bf16.mxu0 0
    %1195 = vmatpush1.bf16.msra.mxu0 0
    %1196 = vmatprep.subr.bf16.mxu0 0
    %1197 = vmatpush1.bf16.msra.mxu0 0
    %1198 = vmatprep.subr.bf16.mxu0 0
    %1199 = vmatpush1.bf16.msra.mxu0 0
    %1200 = vmatprep.subr.bf16.mxu0 0
    %1201 = vmatpush1.bf16.msra.mxu0 0
    %1202 = vmatprep.subr.bf16.mxu0 0
    %1203 = vmatpush1.bf16.msra.mxu0 0
    %1204 = vmatprep.subr.bf16.mxu0 0
    %1205 = vmatpush1.bf16.msra.mxu0 0
    %1206 = vmatprep.subr.bf16.mxu0 0
    %1207 = vmatpush1.bf16.msra.mxu0 0
    %1208 = vmatprep.subr.bf16.mxu0 0
    %1209 = vmatpush1.bf16.msra.mxu0 0
    %1210 = vmatprep.subr.bf16.mxu0 0
    %1211 = vmatpush1.bf16.msra.mxu0 0
    %1212 = vmatprep.subr.bf16.mxu0 0
    %1213 = vmatpush1.bf16.msra.mxu0 0
    %1214 = vmatprep.subr.bf16.mxu0 0
    %1215 = vmatpush1.bf16.msra.mxu0 0
    %1216 = vmatprep.subr.bf16.mxu0 0
    %1217 = vmatpush1.bf16.msra.mxu0 0
    %1218 = vmatprep.subr.bf16.mxu0 0
    %1219 = vmatpush1.bf16.msra.mxu0 0
    %1220 = vmatprep.mubr.bf16.mxu0 0
    %1221 = vmatmul.mubr.bf16.gmra.mrb[0].mxu0 %v1186
    %v1222 = vpop.f32.mrb[0].mxu0
    %v1223 = vadd.f32 0.0, %v1222
    %v1224 = vpop.f32.mrb[0].mxu0
    %v1225 = vpop.f32.mrb[0].mxu0
    %v1226 = vpop.f32.mrb[0].mxu0
    %1227 = vdwg.mxu0
    %v1228 = vsel %vm152, %v1168, 0.0
    %v1229 = vsel %vm152, %v1223, 0.0
    %v1230 = vadd.f32 %v1228, %v1229
    %v1231 = vadd.f32 %v1103, %v1230
    %v1232 = vpack.c.bf16 %v1231, %v1231
    %s1233 = scalar_lea.vmem %s3, 32
    %v1234 = vld [vmem:[%s1233] sm:$0xf]
    %v1235 = vld [vmem:[%s1233 + $0x4] sm:$0xf]
    %v1236 = vld [vmem:[%s1233 + $0x8] sm:$0xf]
    %v1237 = vld [vmem:[%s1233 + $0xc] sm:$0xf]
    %v1238 = vld [vmem:[%s1233 + $0x10] sm:$0xf]
    %v1239 = vld [vmem:[%s1233 + $0x14] sm:$0xf]
    %v1240 = vld [vmem:[%s1233 + $0x18] sm:$0xf]
    %v1241 = vld [vmem:[%s1233 + $0x1c] sm:$0xf]
    %s1242 = scalar_lea.vmem [#allocation8], 2
    %v1243 = vld [vmem:[%s1242] sm:$0x1]
    %v1244 = vld [vmem:[%s1242 + $0x1] sm:$0x1]
    %v1247 = vlaneseq
    %v1248 = vshrl.u32 %v1247, 7
    %v1249 = vsub.s32 0, %v1248
    %v1250 = vrot.slane %v1243, %v1249
    %v1251 = vlaneseq
    %v1252 = vshrl.u32 %v1251, 7
    %v1253 = vsub.s32 0, %v1252
    %v1254 = vrot.slane %v1244, %v1253
    %v1261 = vunpack.c.l.b16 %v1234
    %v1262 = vunpack.c.l.b16 %v1235
    %v1263 = vunpack.c.l.b16 %v1236
    %v1264 = vunpack.c.l.b16 %v1237
    %v1265 = vpack.c.b16 %v1262, %v1261
    %v1266 = vpack.c.b16 %v1264, %v1263
    %v1270 = vsel %vm152, %v1232, 0
    %1272 = vmatprep.subr.bf16.mxu0 0
    %1273 = vmatpush1.bf16.msra.mxu0 %v1265
    %1274 = vmatprep.subr.bf16.mxu0 0
    %1275 = vmatpush1.bf16.msra.mxu0 %v1266
    %1276 = vmatprep.subr.bf16.mxu0 0
    %1277 = vmatpush1.bf16.msra.mxu0 0
    %1278 = vmatprep.subr.bf16.mxu0 0
    %1279 = vmatpush1.bf16.msra.mxu0 0
    %1280 = vmatprep.subr.bf16.mxu0 0
    %1281 = vmatpush1.bf16.msra.mxu0 0
    %1282 = vmatprep.subr.bf16.mxu0 0
    %1283 = vmatpush1.bf16.msra.mxu0 0
    %1284 = vmatprep.subr.bf16.mxu0 0
    %1285 = vmatpush1.bf16.msra.mxu0 0
    %1286 = vmatprep.subr.bf16.mxu0 0
    %1287 = vmatpush1.bf16.msra.mxu0 0
    %1288 = vmatprep.subr.bf16.mxu0 0
    %1289 = vmatpush1.bf16.msra.mxu0 0
    %1290 = vmatprep.subr.bf16.mxu0 0
    %1291 = vmatpush1.bf16.msra.mxu0 0
    %1292 = vmatprep.subr.bf16.mxu0 0
    %1293 = vmatpush1.bf16.msra.mxu0 0
    %1294 = vmatprep.subr.bf16.mxu0 0
    %1295 = vmatpush1.bf16.msra.mxu0 0
    %1296 = vmatprep.subr.bf16.mxu0 0
    %1297 = vmatpush1.bf16.msra.mxu0 0
    %1298 = vmatprep.subr.bf16.mxu0 0
    %1299 = vmatpush1.bf16.msra.mxu0 0
    %1300 = vmatprep.subr.bf16.mxu0 0
    %1301 = vmatpush1.bf16.msra.mxu0 0
    %1302 = vmatprep.subr.bf16.mxu0 0
    %1303 = vmatpush1.bf16.msra.mxu0 0
    %1304 = vmatprep.mubr.bf16.mxu0 0
    %1305 = vmatmul.mubr.bf16.gmra.mrb[0].mxu0 %v1270
    %v1306 = vpop.f32.mrb[0].mxu0
    %v1307 = vadd.f32 %v1250, %v1306
    %v1308 = vpop.f32.mrb[0].mxu0
    %v1309 = vpop.f32.mrb[0].mxu0
    %v1310 = vpop.f32.mrb[0].mxu0
    %1311 = vdwg.mxu0
    %v1316 = vunpack.c.l.b16 %v1238
    %v1317 = vunpack.c.l.b16 %v1239
    %v1318 = vunpack.c.l.b16 %v1240
    %v1319 = vunpack.c.l.b16 %v1241
    %v1320 = vpack.c.b16 %v1317, %v1316
    %v1321 = vpack.c.b16 %v1319, %v1318
    %1324 = vmatprep.subr.bf16.mxu0 0
    %1325 = vmatpush1.bf16.msra.mxu0 %v1320
    %1326 = vmatprep.subr.bf16.mxu0 0
    %1327 = vmatpush1.bf16.msra.mxu0 %v1321
    %1328 = vmatprep.subr.bf16.mxu0 0
    %1329 = vmatpush1.bf16.msra.mxu0 0
    %1330 = vmatprep.subr.bf16.mxu0 0
    %1331 = vmatpush1.bf16.msra.mxu0 0
    %1332 = vmatprep.subr.bf16.mxu0 0
    %1333 = vmatpush1.bf16.msra.mxu0 0
    %1334 = vmatprep.subr.bf16.mxu0 0
    %1335 = vmatpush1.bf16.msra.mxu0 0
    %1336 = vmatprep.subr.bf16.mxu0 0
    %1337 = vmatpush1.bf16.msra.mxu0 0
    %1338 = vmatprep.subr.bf16.mxu0 0
    %1339 = vmatpush1.bf16.msra.mxu0 0
    %1340 = vmatprep.subr.bf16.mxu0 0
    %1341 = vmatpush1.bf16.msra.mxu0 0
    %1342 = vmatprep.subr.bf16.mxu0 0
    %1343 = vmatpush1.bf16.msra.mxu0 0
    %1344 = vmatprep.subr.bf16.mxu0 0
    %1345 = vmatpush1.bf16.msra.mxu0 0
    %1346 = vmatprep.subr.bf16.mxu0 0
    %1347 = vmatpush1.bf16.msra.mxu0 0
    %1348 = vmatprep.subr.bf16.mxu0 0
    %1349 = vmatpush1.bf16.msra.mxu0 0
    %1350 = vmatprep.subr.bf16.mxu0 0
    %1351 = vmatpush1.bf16.msra.mxu0 0
    %1352 = vmatprep.subr.bf16.mxu0 0
    %1353 = vmatpush1.bf16.msra.mxu0 0
    %1354 = vmatprep.subr.bf16.mxu0 0
    %1355 = vmatpush1.bf16.msra.mxu0 0
    %1356 = vmatprep.mubr.bf16.mxu0 0
    %1357 = vmatmul.mubr.bf16.gmra.mrb[0].mxu0 %v1270
    %v1358 = vpop.f32.mrb[0].mxu0
    %v1359 = vadd.f32 %v1254, %v1358
    %v1360 = vpop.f32.mrb[0].mxu0
    %v1361 = vpop.f32.mrb[0].mxu0
    %v1362 = vpop.f32.mrb[0].mxu0
    %1363 = vdwg.mxu0
    %s1364 = scalar_lea.vmem [#allocation7], 32
    %v1365 = vld [vmem:[%s1364] sm:$0xf]
    %v1366 = vld [vmem:[%s1364 + $0x4] sm:$0xf]
    %v1367 = vld [vmem:[%s1364 + $0x8] sm:$0xf]
    %v1368 = vld [vmem:[%s1364 + $0xc] sm:$0xf]
    %v1369 = vld [vmem:[%s1364 + $0x10] sm:$0xf]
    %v1370 = vld [vmem:[%s1364 + $0x14] sm:$0xf]
    %v1371 = vld [vmem:[%s1364 + $0x18] sm:$0xf]
    %v1372 = vld [vmem:[%s1364 + $0x1c] sm:$0xf]
    %v1377 = vunpack.c.l.b16 %v1365
    %v1378 = vunpack.c.l.b16 %v1366
    %v1379 = vunpack.c.l.b16 %v1367
    %v1380 = vunpack.c.l.b16 %v1368
    %v1381 = vpack.c.b16 %v1378, %v1377
    %v1382 = vpack.c.b16 %v1380, %v1379
    %1385 = vmatprep.subr.bf16.mxu0 0
    %1386 = vmatpush1.bf16.msra.mxu0 %v1381
    %1387 = vmatprep.subr.bf16.mxu0 0
    %1388 = vmatpush1.bf16.msra.mxu0 %v1382
    %1389 = vmatprep.subr.bf16.mxu0 0
    %1390 = vmatpush1.bf16.msra.mxu0 0
    %1391 = vmatprep.subr.bf16.mxu0 0
    %1392 = vmatpush1.bf16.msra.mxu0 0
    %1393 = vmatprep.subr.bf16.mxu0 0
    %1394 = vmatpush1.bf16.msra.mxu0 0
    %1395 = vmatprep.subr.bf16.mxu0 0
    %1396 = vmatpush1.bf16.msra.mxu0 0
    %1397 = vmatprep.subr.bf16.mxu0 0
    %1398 = vmatpush1.bf16.msra.mxu0 0
    %1399 = vmatprep.subr.bf16.mxu0 0
    %1400 = vmatpush1.bf16.msra.mxu0 0
    %1401 = vmatprep.subr.bf16.mxu0 0
    %1402 = vmatpush1.bf16.msra.mxu0 0
    %1403 = vmatprep.subr.bf16.mxu0 0
    %1404 = vmatpush1.bf16.msra.mxu0 0
    %1405 = vmatprep.subr.bf16.mxu0 0
    %1406 = vmatpush1.bf16.msra.mxu0 0
    %1407 = vmatprep.subr.bf16.mxu0 0
    %1408 = vmatpush1.bf16.msra.mxu0 0
    %1409 = vmatprep.subr.bf16.mxu0 0
    %1410 = vmatpush1.bf16.msra.mxu0 0
    %1411 = vmatprep.subr.bf16.mxu0 0
    %1412 = vmatpush1.bf16.msra.mxu0 0
    %1413 = vmatprep.subr.bf16.mxu0 0
    %1414 = vmatpush1.bf16.msra.mxu0 0
    %1415 = vmatprep.subr.bf16.mxu0 0
    %1416 = vmatpush1.bf16.msra.mxu0 0
    %1417 = vmatprep.mubr.bf16.mxu0 0
    %1418 = vmatmul.mubr.bf16.gmra.mrb[0].mxu0 %v1270
    %v1419 = vpop.f32.mrb[0].mxu0
    %v1420 = vadd.f32 0.0, %v1419
    %v1421 = vpop.f32.mrb[0].mxu0
    %v1422 = vpop.f32.mrb[0].mxu0
    %v1423 = vpop.f32.mrb[0].mxu0
    %1424 = vdwg.mxu0
    %v1429 = vunpack.c.l.b16 %v1369
    %v1430 = vunpack.c.l.b16 %v1370
    %v1431 = vunpack.c.l.b16 %v1371
    %v1432 = vunpack.c.l.b16 %v1372
    %v1433 = vpack.c.b16 %v1430, %v1429
    %v1434 = vpack.c.b16 %v1432, %v1431
    %1437 = vmatprep.subr.bf16.mxu0 0
    %1438 = vmatpush1.bf16.msra.mxu0 %v1433
    %1439 = vmatprep.subr.bf16.mxu0 0
    %1440 = vmatpush1.bf16.msra.mxu0 %v1434
    %1441 = vmatprep.subr.bf16.mxu0 0
    %1442 = vmatpush1.bf16.msra.mxu0 0
    %1443 = vmatprep.subr.bf16.mxu0 0
    %1444 = vmatpush1.bf16.msra.mxu0 0
    %1445 = vmatprep.subr.bf16.mxu0 0
    %1446 = vmatpush1.bf16.msra.mxu0 0
    %1447 = vmatprep.subr.bf16.mxu0 0
    %1448 = vmatpush1.bf16.msra.mxu0 0
    %1449 = vmatprep.subr.bf16.mxu0 0
    %1450 = vmatpush1.bf16.msra.mxu0 0
    %1451 = vmatprep.subr.bf16.mxu0 0
    %1452 = vmatpush1.bf16.msra.mxu0 0
    %1453 = vmatprep.subr.bf16.mxu0 0
    %1454 = vmatpush1.bf16.msra.mxu0 0
    %1455 = vmatprep.subr.bf16.mxu0 0
    %1456 = vmatpush1.bf16.msra.mxu0 0
    %1457 = vmatprep.subr.bf16.mxu0 0
    %1458 = vmatpush1.bf16.msra.mxu0 0
    %1459 = vmatprep.subr.bf16.mxu0 0
    %1460 = vmatpush1.bf16.msra.mxu0 0
    %1461 = vmatprep.subr.bf16.mxu0 0
    %1462 = vmatpush1.bf16.msra.mxu0 0
    %1463 = vmatprep.subr.bf16.mxu0 0
    %1464 = vmatpush1.bf16.msra.mxu0 0
    %1465 = vmatprep.subr.bf16.mxu0 0
    %1466 = vmatpush1.bf16.msra.mxu0 0
    %1467 = vmatprep.subr.bf16.mxu0 0
    %1468 = vmatpush1.bf16.msra.mxu0 0
    %1469 = vmatprep.mubr.bf16.mxu0 0
    %1470 = vmatmul.mubr.bf16.gmra.mrb[0].mxu0 %v1270
    %v1471 = vpop.f32.mrb[0].mxu0
    %v1472 = vadd.f32 0.0, %v1471
    %v1473 = vpop.f32.mrb[0].mxu0
    %v1474 = vpop.f32.mrb[0].mxu0
    %v1475 = vpop.f32.mrb[0].mxu0
    %1476 = vdwg.mxu0
    %s1477 = scalar_lea.vmem %s6, 32
    %v1478 = vld [vmem:[%s1477] sm:$0xf]
    %v1479 = vld [vmem:[%s1477 + $0x4] sm:$0xf]
    %v1480 = vld [vmem:[%s1477 + $0x8] sm:$0xf]
    %v1481 = vld [vmem:[%s1477 + $0xc] sm:$0xf]
    %v1482 = vld [vmem:[%s1477 + $0x10] sm:$0xf]
    %v1483 = vld [vmem:[%s1477 + $0x14] sm:$0xf]
    %v1484 = vld [vmem:[%s1477 + $0x18] sm:$0xf]
    %v1485 = vld [vmem:[%s1477 + $0x1c] sm:$0xf]
    %v1490 = vunpack.c.l.b16 %v1478
    %v1491 = vunpack.c.l.b16 %v1479
    %v1492 = vunpack.c.l.b16 %v1480
    %v1493 = vunpack.c.l.b16 %v1481
    %v1494 = vpack.c.b16 %v1491, %v1490
    %v1495 = vpack.c.b16 %v1493, %v1492
    %1498 = vmatprep.subr.bf16.mxu0 0
    %1499 = vmatpush1.bf16.msra.mxu0 %v1494
    %1500 = vmatprep.subr.bf16.mxu0 0
    %1501 = vmatpush1.bf16.msra.mxu0 %v1495
    %1502 = vmatprep.subr.bf16.mxu0 0
    %1503 = vmatpush1.bf16.msra.mxu0 0
    %1504 = vmatprep.subr.bf16.mxu0 0
    %1505 = vmatpush1.bf16.msra.mxu0 0
    %1506 = vmatprep.subr.bf16.mxu0 0
    %1507 = vmatpush1.bf16.msra.mxu0 0
    %1508 = vmatprep.subr.bf16.mxu0 0
    %1509 = vmatpush1.bf16.msra.mxu0 0
    %1510 = vmatprep.subr.bf16.mxu0 0
    %1511 = vmatpush1.bf16.msra.mxu0 0
    %1512 = vmatprep.subr.bf16.mxu0 0
    %1513 = vmatpush1.bf16.msra.mxu0 0
    %1514 = vmatprep.subr.bf16.mxu0 0
    %1515 = vmatpush1.bf16.msra.mxu0 0
    %1516 = vmatprep.subr.bf16.mxu0 0
    %1517 = vmatpush1.bf16.msra.mxu0 0
    %1518 = vmatprep.subr.bf16.mxu0 0
    %1519 = vmatpush1.bf16.msra.mxu0 0
    %1520 = vmatprep.subr.bf16.mxu0 0
    %1521 = vmatpush1.bf16.msra.mxu0 0
    %1522 = vmatprep.subr.bf16.mxu0 0
    %1523 = vmatpush1.bf16.msra.mxu0 0
    %1524 = vmatprep.subr.bf16.mxu0 0
    %1525 = vmatpush1.bf16.msra.mxu0 0
    %1526 = vmatprep.subr.bf16.mxu0 0
    %1527 = vmatpush1.bf16.msra.mxu0 0
    %1528 = vmatprep.subr.bf16.mxu0 0
    %1529 = vmatpush1.bf16.msra.mxu0 0
    %1530 = vmatprep.mubr.bf16.mxu0 0
    %1531 = vmatmul.mubr.bf16.gmra.mrb[0].mxu0 %v1270
    %v1532 = vpop.f32.mrb[0].mxu0
    %v1533 = vadd.f32 0.0, %v1532
    %v1534 = vpop.f32.mrb[0].mxu0
    %v1535 = vpop.f32.mrb[0].mxu0
    %v1536 = vpop.f32.mrb[0].mxu0
    %1537 = vdwg.mxu0
    %v1542 = vunpack.c.l.b16 %v1482
    %v1543 = vunpack.c.l.b16 %v1483
    %v1544 = vunpack.c.l.b16 %v1484
    %v1545 = vunpack.c.l.b16 %v1485
    %v1546 = vpack.c.b16 %v1543, %v1542
    %v1547 = vpack.c.b16 %v1545, %v1544
    %1550 = vmatprep.subr.bf16.mxu0 0
    %1551 = vmatpush1.bf16.msra.mxu0 %v1546
    %1552 = vmatprep.subr.bf16.mxu0 0
    %1553 = vmatpush1.bf16.msra.mxu0 %v1547
    %1554 = vmatprep.subr.bf16.mxu0 0
    %1555 = vmatpush1.bf16.msra.mxu0 0
    %1556 = vmatprep.subr.bf16.mxu0 0
    %1557 = vmatpush1.bf16.msra.mxu0 0
    %1558 = vmatprep.subr.bf16.mxu0 0
    %1559 = vmatpush1.bf16.msra.mxu0 0
    %1560 = vmatprep.subr.bf16.mxu0 0
    %1561 = vmatpush1.bf16.msra.mxu0 0
    %1562 = vmatprep.subr.bf16.mxu0 0
    %1563 = vmatpush1.bf16.msra.mxu0 0
    %1564 = vmatprep.subr.bf16.mxu0 0
    %1565 = vmatpush1.bf16.msra.mxu0 0
    %1566 = vmatprep.subr.bf16.mxu0 0
    %1567 = vmatpush1.bf16.msra.mxu0 0
    %1568 = vmatprep.subr.bf16.mxu0 0
    %1569 = vmatpush1.bf16.msra.mxu0 0
    %1570 = vmatprep.subr.bf16.mxu0 0
    %1571 = vmatpush1.bf16.msra.mxu0 0
    %1572 = vmatprep.subr.bf16.mxu0 0
    %1573 = vmatpush1.bf16.msra.mxu0 0
    %1574 = vmatprep.subr.bf16.mxu0 0
    %1575 = vmatpush1.bf16.msra.mxu0 0
    %1576 = vmatprep.subr.bf16.mxu0 0
    %1577 = vmatpush1.bf16.msra.mxu0 0
    %1578 = vmatprep.subr.bf16.mxu0 0
    %1579 = vmatpush1.bf16.msra.mxu0 0
    %1580 = vmatprep.subr.bf16.mxu0 0
    %1581 = vmatpush1.bf16.msra.mxu0 0
    %1582 = vmatprep.mubr.bf16.mxu0 0
    %1583 = vmatmul.mubr.bf16.gmra.mrb[0].mxu0 %v1270
    %v1584 = vpop.f32.mrb[0].mxu0
    %v1585 = vadd.f32 0.0, %v1584
    %v1586 = vpop.f32.mrb[0].mxu0
    %v1587 = vpop.f32.mrb[0].mxu0
    %v1588 = vpop.f32.mrb[0].mxu0
    %1589 = vdwg.mxu0
    %v1590 = vpack.c.bf16 %v1420, %v1420
    %v1591 = vpack.c.bf16 %v1472, %v1472
    %v1593 = vsel %vm507, %v1590, 0
    %1595 = vmatprep.subr.bf16.mxu0 0
    %1596 = vmatpush1.bf16.msra.mxu0 %v1593
    %1597 = vmatprep.subr.bf16.mxu0 0
    %1598 = vmatpush1.bf16.msra.mxu0 0
    %1599 = vmatprep.subr.bf16.mxu0 0
    %1600 = vmatpush1.bf16.msra.mxu0 0
    %1601 = vmatprep.subr.bf16.mxu0 0
    %1602 = vmatpush1.bf16.msra.mxu0 0
    %1603 = vmatprep.subr.bf16.mxu0 0
    %1604 = vmatpush1.bf16.msra.mxu0 0
    %1605 = vmatprep.subr.bf16.mxu0 0
    %1606 = vmatpush1.bf16.msra.mxu0 0
    %1607 = vmatprep.subr.bf16.mxu0 0
    %1608 = vmatpush1.bf16.msra.mxu0 0
    %1609 = vmatprep.subr.bf16.mxu0 0
    %1610 = vmatpush1.bf16.msra.mxu0 0
    %1611 = vmatprep.subr.bf16.mxu0 0
    %1612 = vmatpush1.bf16.msra.mxu0 0
    %1613 = vmatprep.subr.bf16.mxu0 0
    %1614 = vmatpush1.bf16.msra.mxu0 0
    %1615 = vmatprep.subr.bf16.mxu0 0
    %1616 = vmatpush1.bf16.msra.mxu0 0
    %1617 = vmatprep.subr.bf16.mxu0 0
    %1618 = vmatpush1.bf16.msra.mxu0 0
    %1619 = vmatprep.subr.bf16.mxu0 0
    %1620 = vmatpush1.bf16.msra.mxu0 0
    %1621 = vmatprep.subr.bf16.mxu0 0
    %1622 = vmatpush1.bf16.msra.mxu0 0
    %1623 = vmatprep.subr.bf16.mxu0 0
    %1624 = vmatpush1.bf16.msra.mxu0 0
    %1625 = vmatprep.subr.bf16.mxu0 0
    %1626 = vmatpush1.bf16.msra.mxu0 0
    %1627 = vmatprep.mubr.bf16.mxu0 0
    %1628 = vmatmul.mubr.bf16.gmra.mrb[0].mxu0 %v496
    %v1629 = vpop.f32.mrb[0].mxu0
    %v1630 = vadd.f32 0.0, %v1629
    %v1631 = vpop.f32.mrb[0].mxu0
    %v1632 = vpop.f32.mrb[0].mxu0
    %v1633 = vadd.f32 0.0, %v1632
    %v1634 = vpop.f32.mrb[0].mxu0
    %1635 = vmatprep.mubr.bf16.mxu0 0
    %1636 = vmatmul.mubr.bf16.gmra.mrb[0].mxu0 %v499
    %v1637 = vpop.f32.mrb[0].mxu0
    %v1638 = vadd.f32 0.0, %v1637
    %v1639 = vpop.f32.mrb[0].mxu0
    %v1640 = vpop.f32.mrb[0].mxu0
    %v1641 = vadd.f32 0.0, %v1640
    %v1642 = vpop.f32.mrb[0].mxu0
    %1643 = vmatprep.mubr.bf16.mxu0 0
    %1644 = vmatmul.mubr.bf16.gmra.mrb[0].mxu0 %v502
    %v1645 = vpop.f32.mrb[0].mxu0
    %v1646 = vadd.f32 0.0, %v1645
    %v1647 = vpop.f32.mrb[0].mxu0
    %v1648 = vpop.f32.mrb[0].mxu0
    %v1649 = vadd.f32 0.0, %v1648
    %v1650 = vpop.f32.mrb[0].mxu0
    %1651 = vmatprep.mubr.bf16.mxu0 0
    %1652 = vmatmul.mubr.bf16.gmra.mrb[0].mxu0 %v505
    %v1653 = vpop.f32.mrb[0].mxu0
    %v1654 = vadd.f32 0.0, %v1653
    %v1655 = vpop.f32.mrb[0].mxu0
    %v1656 = vpop.f32.mrb[0].mxu0
    %v1657 = vadd.f32 0.0, %v1656
    %v1658 = vpop.f32.mrb[0].mxu0
    %1659 = vdwg.mxu0
    %v1661 = vsel %vm507, %v1591, 0
    %1663 = vmatprep.subr.bf16.mxu0 0
    %1664 = vmatpush1.bf16.msra.mxu0 %v1661
    %1665 = vmatprep.subr.bf16.mxu0 0
    %1666 = vmatpush1.bf16.msra.mxu0 0
    %1667 = vmatprep.subr.bf16.mxu0 0
    %1668 = vmatpush1.bf16.msra.mxu0 0
    %1669 = vmatprep.subr.bf16.mxu0 0
    %1670 = vmatpush1.bf16.msra.mxu0 0
    %1671 = vmatprep.subr.bf16.mxu0 0
    %1672 = vmatpush1.bf16.msra.mxu0 0
    %1673 = vmatprep.subr.bf16.mxu0 0
    %1674 = vmatpush1.bf16.msra.mxu0 0
    %1675 = vmatprep.subr.bf16.mxu0 0
    %1676 = vmatpush1.bf16.msra.mxu0 0
    %1677 = vmatprep.subr.bf16.mxu0 0
    %1678 = vmatpush1.bf16.msra.mxu0 0
    %1679 = vmatprep.subr.bf16.mxu0 0
    %1680 = vmatpush1.bf16.msra.mxu0 0
    %1681 = vmatprep.subr.bf16.mxu0 0
    %1682 = vmatpush1.bf16.msra.mxu0 0
    %1683 = vmatprep.subr.bf16.mxu0 0
    %1684 = vmatpush1.bf16.msra.mxu0 0
    %1685 = vmatprep.subr.bf16.mxu0 0
    %1686 = vmatpush1.bf16.msra.mxu0 0
    %1687 = vmatprep.subr.bf16.mxu0 0
    %1688 = vmatpush1.bf16.msra.mxu0 0
    %1689 = vmatprep.subr.bf16.mxu0 0
    %1690 = vmatpush1.bf16.msra.mxu0 0
    %1691 = vmatprep.subr.bf16.mxu0 0
    %1692 = vmatpush1.bf16.msra.mxu0 0
    %1693 = vmatprep.subr.bf16.mxu0 0
    %1694 = vmatpush1.bf16.msra.mxu0 0
    %1695 = vmatprep.mubr.bf16.mxu0 0
    %1696 = vmatmul.mubr.bf16.gmra.mrb[0].mxu0 %v496
    %v1697 = vpop.f32.mrb[0].mxu0
    %v1698 = vadd.f32 0.0, %v1697
    %v1699 = vpop.f32.mrb[0].mxu0
    %v1700 = vpop.f32.mrb[0].mxu0
    %v1701 = vadd.f32 0.0, %v1700
    %v1702 = vpop.f32.mrb[0].mxu0
    %1703 = vmatprep.mubr.bf16.mxu0 0
    %1704 = vmatmul.mubr.bf16.gmra.mrb[0].mxu0 %v499
    %v1705 = vpop.f32.mrb[0].mxu0
    %v1706 = vadd.f32 0.0, %v1705
    %v1707 = vpop.f32.mrb[0].mxu0
    %v1708 = vpop.f32.mrb[0].mxu0
    %v1709 = vadd.f32 0.0, %v1708
    %v1710 = vpop.f32.mrb[0].mxu0
    %1711 = vmatprep.mubr.bf16.mxu0 0
    %1712 = vmatmul.mubr.bf16.gmra.mrb[0].mxu0 %v502
    %v1713 = vpop.f32.mrb[0].mxu0
    %v1714 = vadd.f32 0.0, %v1713
    %v1715 = vpop.f32.mrb[0].mxu0
    %v1716 = vpop.f32.mrb[0].mxu0
    %v1717 = vadd.f32 0.0, %v1716
    %v1718 = vpop.f32.mrb[0].mxu0
    %1719 = vmatprep.mubr.bf16.mxu0 0
    %1720 = vmatmul.mubr.bf16.gmra.mrb[0].mxu0 %v505
    %v1721 = vpop.f32.mrb[0].mxu0
    %v1722 = vadd.f32 0.0, %v1721
    %v1723 = vpop.f32.mrb[0].mxu0
    %v1724 = vpop.f32.mrb[0].mxu0
    %v1725 = vadd.f32 0.0, %v1724
    %v1726 = vpop.f32.mrb[0].mxu0
    %1727 = vdwg.mxu0
    %v1728 = vadd.f32 %v1630, %v1307
    %v1729 = vadd.f32 %v1633, %v1307
    %v1730 = vadd.f32 %v1638, %v1307
    %v1731 = vadd.f32 %v1641, %v1307
    %v1732 = vadd.f32 %v1646, %v1307
    %v1733 = vadd.f32 %v1649, %v1307
    %v1734 = vadd.f32 %v1654, %v1307
    %v1735 = vadd.f32 %v1657, %v1307
    %v1736 = vadd.f32 %v1698, %v1359
    %v1737 = vadd.f32 %v1701, %v1359
    %v1738 = vadd.f32 %v1706, %v1359
    %v1739 = vadd.f32 %v1709, %v1359
    %v1740 = vadd.f32 %v1714, %v1359
    %v1741 = vadd.f32 %v1717, %v1359
    %v1742 = vadd.f32 %v1722, %v1359
    %v1743 = vadd.f32 %v1725, %v1359
    %vm1744 = vcmp.gt.f32.partialorder %v1728, 0.0
    %vm1745 = vcmp.gt.f32.partialorder %v1729, 0.0
    %vm1746 = vcmp.gt.f32.partialorder %v1730, 0.0
    %vm1747 = vcmp.gt.f32.partialorder %v1731, 0.0
    %vm1748 = vcmp.gt.f32.partialorder %v1732, 0.0
    %vm1749 = vcmp.gt.f32.partialorder %v1733, 0.0
    %vm1750 = vcmp.gt.f32.partialorder %v1734, 0.0
    %vm1751 = vcmp.gt.f32.partialorder %v1735, 0.0
    %vm1752 = vcmp.gt.f32.partialorder %v1736, 0.0
    %vm1753 = vcmp.gt.f32.partialorder %v1737, 0.0
    %vm1754 = vcmp.gt.f32.partialorder %v1738, 0.0
    %vm1755 = vcmp.gt.f32.partialorder %v1739, 0.0
    %vm1756 = vcmp.gt.f32.partialorder %v1740, 0.0
    %vm1757 = vcmp.gt.f32.partialorder %v1741, 0.0
    %vm1758 = vcmp.gt.f32.partialorder %v1742, 0.0
    %vm1759 = vcmp.gt.f32.partialorder %v1743, 0.0
    %v1760 = vmul.f32 %v1728, 0.2
    %v1761 = vmul.f32 %v1729, 0.2
    %v1762 = vmul.f32 %v1730, 0.2
    %v1763 = vmul.f32 %v1731, 0.2
    %v1764 = vmul.f32 %v1732, 0.2
    %v1765 = vmul.f32 %v1733, 0.2
    %v1766 = vmul.f32 %v1734, 0.2
    %v1767 = vmul.f32 %v1735, 0.2
    %v1768 = vmul.f32 %v1736, 0.2
    %v1769 = vmul.f32 %v1737, 0.2
    %v1770 = vmul.f32 %v1738, 0.2
    %v1771 = vmul.f32 %v1739, 0.2
    %v1772 = vmul.f32 %v1740, 0.2
    %v1773 = vmul.f32 %v1741, 0.2
    %v1774 = vmul.f32 %v1742, 0.2
    %v1775 = vmul.f32 %v1743, 0.2
    %v1776 = vsel %vm1744, %v1728, %v1760
    %v1777 = vsel %vm1745, %v1729, %v1761
    %v1778 = vsel %vm1746, %v1730, %v1762
    %v1779 = vsel %vm1747, %v1731, %v1763
    %v1780 = vsel %vm1748, %v1732, %v1764
    %v1781 = vsel %vm1749, %v1733, %v1765
    %v1782 = vsel %vm1750, %v1734, %v1766
    %v1783 = vsel %vm1751, %v1735, %v1767
    %v1784 = vsel %vm1752, %v1736, %v1768
    %v1785 = vsel %vm1753, %v1737, %v1769
    %v1786 = vsel %vm1754, %v1738, %v1770
    %v1787 = vsel %vm1755, %v1739, %v1771
    %v1788 = vsel %vm1756, %v1740, %v1772
    %v1789 = vsel %vm1757, %v1741, %v1773
    %v1790 = vsel %vm1758, %v1742, %v1774
    %v1791 = vsel %vm1759, %v1743, %v1775
    %s1792 = scalar_lea.vmem %s7, 2
    %v1793 = vld [vmem:[%s1792] sm:$0x1]
    %v1794 = vld [vmem:[%s1792 + $0x1] sm:$0x1]
    %v1797 = vlaneseq
    %v1798 = vshrl.u32 %v1797, 7
    %v1799 = vsub.s32 0, %v1798
    %v1800 = vrot.slane %v1793, %v1799
    %v1801 = vlaneseq
    %v1802 = vshrl.u32 %v1801, 7
    %v1803 = vsub.s32 0, %v1802
    %v1804 = vrot.slane %v1794, %v1803
    %v1807 = vmul.f32 %v1776, %v1800
    %v1808 = vmul.f32 %v1777, %v1800
    %v1809 = vmul.f32 %v1778, %v1800
    %v1810 = vmul.f32 %v1779, %v1800
    %v1811 = vmul.f32 %v1780, %v1800
    %v1812 = vmul.f32 %v1781, %v1800
    %v1813 = vmul.f32 %v1782, %v1800
    %v1814 = vmul.f32 %v1783, %v1800
    %v1815 = vmul.f32 %v1784, %v1804
    %v1816 = vmul.f32 %v1785, %v1804
    %v1817 = vmul.f32 %v1786, %v1804
    %v1818 = vmul.f32 %v1787, %v1804
    %v1819 = vmul.f32 %v1788, %v1804
    %v1820 = vmul.f32 %v1789, %v1804
    %v1821 = vmul.f32 %v1790, %v1804
    %v1822 = vmul.f32 %v1791, %v1804
    %v1823 = vsel %vm152, %v1807, 0.0
    %1824 = vadd.xlane.f32.xlu0 %v1823
    %v1825 = vpop.xlane.xlu0 %1824
    %v1826 = vsel %vm152, %v1808, 0.0
    %1827 = vadd.xlane.f32.xlu0 %v1826
    %v1828 = vpop.xlane.xlu0 %1827
    %v1829 = vsel %vm152, %v1809, 0.0
    %1830 = vadd.xlane.f32.xlu0 %v1829
    %v1831 = vpop.xlane.xlu0 %1830
    %v1832 = vsel %vm152, %v1810, 0.0
    %1833 = vadd.xlane.f32.xlu0 %v1832
    %v1834 = vpop.xlane.xlu0 %1833
    %v1835 = vsel %vm152, %v1811, 0.0
    %1836 = vadd.xlane.f32.xlu0 %v1835
    %v1837 = vpop.xlane.xlu0 %1836
    %v1838 = vsel %vm152, %v1812, 0.0
    %1839 = vadd.xlane.f32.xlu0 %v1838
    %v1840 = vpop.xlane.xlu0 %1839
    %v1841 = vsel %vm152, %v1813, 0.0
    %1842 = vadd.xlane.f32.xlu0 %v1841
    %v1843 = vpop.xlane.xlu0 %1842
    %v1844 = vsel %vm152, %v1814, 0.0
    %1845 = vadd.xlane.f32.xlu0 %v1844
    %v1846 = vpop.xlane.xlu0 %1845
    %v1847 = vsel %vm152, %v1815, 0.0
    %1848 = vadd.xlane.f32.xlu0 %v1847
    %v1849 = vpop.xlane.xlu0 %1848
    %v1850 = vsel %vm152, %v1816, 0.0
    %1851 = vadd.xlane.f32.xlu0 %v1850
    %v1852 = vpop.xlane.xlu0 %1851
    %v1853 = vsel %vm152, %v1817, 0.0
    %1854 = vadd.xlane.f32.xlu0 %v1853
    %v1855 = vpop.xlane.xlu0 %1854
    %v1856 = vsel %vm152, %v1818, 0.0
    %1857 = vadd.xlane.f32.xlu0 %v1856
    %v1858 = vpop.xlane.xlu0 %1857
    %v1859 = vsel %vm152, %v1819, 0.0
    %1860 = vadd.xlane.f32.xlu0 %v1859
    %v1861 = vpop.xlane.xlu0 %1860
    %v1862 = vsel %vm152, %v1820, 0.0
    %1863 = vadd.xlane.f32.xlu0 %v1862
    %v1864 = vpop.xlane.xlu0 %1863
    %v1865 = vsel %vm152, %v1821, 0.0
    %1866 = vadd.xlane.f32.xlu0 %v1865
    %v1867 = vpop.xlane.xlu0 %1866
    %v1868 = vsel %vm152, %v1822, 0.0
    %1869 = vadd.xlane.f32.xlu0 %v1868
    %v1870 = vpop.xlane.xlu0 %1869
    %1872 = vset.pattern.permute.xlu0 0
    %1873 = vperm.xlu0 %1872, %v1533
    %v1874 = vpop.permute.xlu0 %1873
    %1877 = vset.pattern.permute.xlu0 0
    %1878 = vperm.xlu0 %1877, %v1585
    %v1879 = vpop.permute.xlu0 %1878
    %v1897 = vlaneseq
    %v1898 = vshrl.u32 %v1897, 7
    %v1899 = vsub.s32 %v813, %v1898
    %v1900 = vrot.slane %v1825, %v1899
    %v1901 = vlaneseq
    %v1902 = vshrl.u32 %v1901, 7
    %v1903 = vsub.s32 %v813, %v1902
    %v1904 = vrot.slane %v1828, %v1903
    %v1905 = vlaneseq
    %v1906 = vshrl.u32 %v1905, 7
    %v1907 = vsub.s32 %v813, %v1906
    %v1908 = vrot.slane %v1831, %v1907
    %v1909 = vlaneseq
    %v1910 = vshrl.u32 %v1909, 7
    %v1911 = vsub.s32 %v813, %v1910
    %v1912 = vrot.slane %v1834, %v1911
    %v1913 = vlaneseq
    %v1914 = vshrl.u32 %v1913, 7
    %v1915 = vsub.s32 %v813, %v1914
    %v1916 = vrot.slane %v1837, %v1915
    %v1917 = vlaneseq
    %v1918 = vshrl.u32 %v1917, 7
    %v1919 = vsub.s32 %v813, %v1918
    %v1920 = vrot.slane %v1840, %v1919
    %v1921 = vlaneseq
    %v1922 = vshrl.u32 %v1921, 7
    %v1923 = vsub.s32 %v813, %v1922
    %v1924 = vrot.slane %v1843, %v1923
    %v1925 = vlaneseq
    %v1926 = vshrl.u32 %v1925, 7
    %v1927 = vsub.s32 %v813, %v1926
    %v1928 = vrot.slane %v1846, %v1927
    %v1929 = vlaneseq
    %v1930 = vshrl.u32 %v1929, 7
    %v1931 = vsub.s32 %v813, %v1930
    %v1932 = vrot.slane %v1849, %v1931
    %v1933 = vlaneseq
    %v1934 = vshrl.u32 %v1933, 7
    %v1935 = vsub.s32 %v813, %v1934
    %v1936 = vrot.slane %v1852, %v1935
    %v1937 = vlaneseq
    %v1938 = vshrl.u32 %v1937, 7
    %v1939 = vsub.s32 %v813, %v1938
    %v1940 = vrot.slane %v1855, %v1939
    %v1941 = vlaneseq
    %v1942 = vshrl.u32 %v1941, 7
    %v1943 = vsub.s32 %v813, %v1942
    %v1944 = vrot.slane %v1858, %v1943
    %v1945 = vlaneseq
    %v1946 = vshrl.u32 %v1945, 7
    %v1947 = vsub.s32 %v813, %v1946
    %v1948 = vrot.slane %v1861, %v1947
    %v1949 = vlaneseq
    %v1950 = vshrl.u32 %v1949, 7
    %v1951 = vsub.s32 %v813, %v1950
    %v1952 = vrot.slane %v1864, %v1951
    %v1953 = vlaneseq
    %v1954 = vshrl.u32 %v1953, 7
    %v1955 = vsub.s32 %v813, %v1954
    %v1956 = vrot.slane %v1867, %v1955
    %v1957 = vlaneseq
    %v1958 = vshrl.u32 %v1957, 7
    %v1959 = vsub.s32 %v813, %v1958
    %v1960 = vrot.slane %v1870, %v1959
    %v1961 = vsel %vm878, %v1904, %v1900
    %v1962 = vsel %vm880, %v1908, %v1961
    %v1963 = vsel %vm882, %v1912, %v1962
    %v1964 = vsel %vm884, %v1916, %v1963
    %v1965 = vsel %vm886, %v1920, %v1964
    %v1966 = vsel %vm888, %v1924, %v1965
    %v1967 = vsel %vm890, %v1928, %v1966
    %v1968 = vsel %vm878, %v1936, %v1932
    %v1969 = vsel %vm880, %v1940, %v1968
    %v1970 = vsel %vm882, %v1944, %v1969
    %v1971 = vsel %vm884, %v1948, %v1970
    %v1972 = vsel %vm886, %v1952, %v1971
    %v1973 = vsel %vm888, %v1956, %v1972
    %v1974 = vsel %vm890, %v1960, %v1973
    %v1977 = vadd.f32 %v1874, %v1967
    %v1978 = vadd.f32 %v1879, %v1974
    %s1979 = scalar_lea.vmem %s8, 2
    %v1980 = vld [vmem:[%s1979] sm:$0x1]
    %v1981 = vld [vmem:[%s1979 + $0x1] sm:$0x1]
    %v1984 = vlaneseq
    %v1985 = vshrl.u32 %v1984, 7
    %v1986 = vsub.s32 0, %v1985
    %v1987 = vrot.slane %v1980, %v1986
    %v1988 = vlaneseq
    %v1989 = vshrl.u32 %v1988, 7
    %v1990 = vsub.s32 0, %v1989
    %v1991 = vrot.slane %v1981, %v1990
    %1992 = vset.pattern.permute.xlu0 0
    %1993 = vperm.xlu0 %1992, %v1987
    %v1994 = vpop.permute.xlu0 %1993
    %1996 = vset.pattern.permute.xlu0 0
    %1997 = vperm.xlu0 %1996, %v1991
    %v1998 = vpop.permute.xlu0 %1997
    %v2000 = vadd.f32 %v1977, %v1994
    %v2001 = vadd.f32 %v1978, %v1998
    %vm2002 = vcmp.gt.f32.partialorder %v2000, 0.0
    %vm2003 = vcmp.gt.f32.partialorder %v2001, 0.0
    %v2004 = vmul.f32 %v2000, 0.2
    %v2005 = vmul.f32 %v2001, 0.2
    %v2006 = vsel %vm2002, %v2000, %v2004
    %v2007 = vsel %vm2003, %v2001, %v2005
    %v2008 = vadd.f32 %v2006, %v115
    %v2009 = vadd.f32 %v2007, %v115
    %v2010 = vsel %vm494, %v2008, -inf
    %2011 = vmax.xlane.f32.xlu0 %v2010
    %v2012 = vpop.xlane.xlu0 %2011
    %v2013 = vsel %vm494, %v2009, -inf
    %2014 = vmax.xlane.f32.xlu0 %v2013
    %v2015 = vpop.xlane.xlu0 %2014
    %v2016 = vsub.f32 %v2008, %v2012
    %v2017 = vsub.f32 %v2009, %v2015
    %v2018 = vmul.f32 %v2016, 1.442695
    %v2019 = vpow.pop %v2018
    %v2020 = vmul.f32 %v2017, 1.442695
    %v2021 = vpow.pop %v2020
    %v2022 = vsel %vm494, %v2019, 0.0
    %2023 = vadd.xlane.f32.xlu0 %v2022
    %v2024 = vpop.xlane.xlu0 %2023
    %v2025 = vsel %vm494, %v2021, 0.0
    %2026 = vadd.xlane.f32.xlu0 %v2025
    %v2027 = vpop.xlane.xlu0 %2026
    %v2028 = vrcp.pop %v2024
    %v2029 = vrcp.pop %v2027
    %v2030 = vmul.f32 %v2019, %v2028
    %v2031 = vmul.f32 %v2021, %v2029
    %v2032 = vpack.c.bf16 %v2030, %v2030
    %v2033 = vpack.c.bf16 %v2031, %v2031
    %v2035 = vsel %vm494, %v2032, 0
    %v2037 = vsel %vm507, %v1232, 0
    %2039 = vmatprep.subr.bf16.mxu0 0
    %2040 = vmatpush1.bf16.msra.mxu0 %v2037
    %2041 = vmatprep.subr.bf16.mxu0 0
    %2042 = vmatpush1.bf16.msra.mxu0 0
    %2043 = vmatprep.subr.bf16.mxu0 0
    %2044 = vmatpush1.bf16.msra.mxu0 0
    %2045 = vmatprep.subr.bf16.mxu0 0
    %2046 = vmatpush1.bf16.msra.mxu0 0
    %2047 = vmatprep.subr.bf16.mxu0 0
    %2048 = vmatpush1.bf16.msra.mxu0 0
    %2049 = vmatprep.subr.bf16.mxu0 0
    %2050 = vmatpush1.bf16.msra.mxu0 0
    %2051 = vmatprep.subr.bf16.mxu0 0
    %2052 = vmatpush1.bf16.msra.mxu0 0
    %2053 = vmatprep.subr.bf16.mxu0 0
    %2054 = vmatpush1.bf16.msra.mxu0 0
    %2055 = vmatprep.subr.bf16.mxu0 0
    %2056 = vmatpush1.bf16.msra.mxu0 0
    %2057 = vmatprep.subr.bf16.mxu0 0
    %2058 = vmatpush1.bf16.msra.mxu0 0
    %2059 = vmatprep.subr.bf16.mxu0 0
    %2060 = vmatpush1.bf16.msra.mxu0 0
    %2061 = vmatprep.subr.bf16.mxu0 0
    %2062 = vmatpush1.bf16.msra.mxu0 0
    %2063 = vmatprep.subr.bf16.mxu0 0
    %2064 = vmatpush1.bf16.msra.mxu0 0
    %2065 = vmatprep.subr.bf16.mxu0 0
    %2066 = vmatpush1.bf16.msra.mxu0 0
    %2067 = vmatprep.subr.bf16.mxu0 0
    %2068 = vmatpush1.bf16.msra.mxu0 0
    %2069 = vmatprep.subr.bf16.mxu0 0
    %2070 = vmatpush1.bf16.msra.mxu0 0
    %2071 = vmatprep.mubr.bf16.mxu0 0
    %2072 = vmatmul.mubr.bf16.gmra.mrb[0].mxu0 %v2035
    %v2073 = vpop.f32.mrb[0].mxu0
    %v2074 = vadd.f32 0.0, %v2073
    %v2075 = vpop.f32.mrb[0].mxu0
    %v2076 = vpop.f32.mrb[0].mxu0
    %v2077 = vpop.f32.mrb[0].mxu0
    %2078 = vdwg.mxu0
    %v2080 = vsel %vm494, %v2033, 0
    %2082 = vmatprep.subr.bf16.mxu0 0
    %2083 = vmatpush1.bf16.msra.mxu0 %v2037
    %2084 = vmatprep.subr.bf16.mxu0 0
    %2085 = vmatpush1.bf16.msra.mxu0 0
    %2086 = vmatprep.subr.bf16.mxu0 0
    %2087 = vmatpush1.bf16.msra.mxu0 0
    %2088 = vmatprep.subr.bf16.mxu0 0
    %2089 = vmatpush1.bf16.msra.mxu0 0
    %2090 = vmatprep.subr.bf16.mxu0 0
    %2091 = vmatpush1.bf16.msra.mxu0 0
    %2092 = vmatprep.subr.bf16.mxu0 0
    %2093 = vmatpush1.bf16.msra.mxu0 0
    %2094 = vmatprep.subr.bf16.mxu0 0
    %2095 = vmatpush1.bf16.msra.mxu0 0
    %2096 = vmatprep.subr.bf16.mxu0 0
    %2097 = vmatpush1.bf16.msra.mxu0 0
    %2098 = vmatprep.subr.bf16.mxu0 0
    %2099 = vmatpush1.bf16.msra.mxu0 0
    %2100 = vmatprep.subr.bf16.mxu0 0
    %2101 = vmatpush1.bf16.msra.mxu0 0
    %2102 = vmatprep.subr.bf16.mxu0 0
    %2103 = vmatpush1.bf16.msra.mxu0 0
    %2104 = vmatprep.subr.bf16.mxu0 0
    %2105 = vmatpush1.bf16.msra.mxu0 0
    %2106 = vmatprep.subr.bf16.mxu0 0
    %2107 = vmatpush1.bf16.msra.mxu0 0
    %2108 = vmatprep.subr.bf16.mxu0 0
    %2109 = vmatpush1.bf16.msra.mxu0 0
    %2110 = vmatprep.subr.bf16.mxu0 0
    %2111 = vmatpush1.bf16.msra.mxu0 0
    %2112 = vmatprep.subr.bf16.mxu0 0
    %2113 = vmatpush1.bf16.msra.mxu0 0
    %2114 = vmatprep.mubr.bf16.mxu0 0
    %2115 = vmatmul.mubr.bf16.gmra.mrb[0].mxu0 %v2080
    %v2116 = vpop.f32.mrb[0].mxu0
    %v2117 = vadd.f32 0.0, %v2116
    %v2118 = vpop.f32.mrb[0].mxu0
    %v2119 = vpop.f32.mrb[0].mxu0
    %v2120 = vpop.f32.mrb[0].mxu0
    %2121 = vdwg.mxu0
    %s2122 = scalar_lea.vmem [#allocation10], 16
    %v2123 = vld [vmem:[%s2122] sm:$0xf]
    %v2124 = vld [vmem:[%s2122 + $0x4] sm:$0xf]
    %v2125 = vld [vmem:[%s2122 + $0x8] sm:$0xf]
    %v2126 = vld [vmem:[%s2122 + $0xc] sm:$0xf]
    %s2127 = scalar_lea.vmem %s11, 1
    %v2128 = vld [vmem:[%s2127] sm:$0x1]
    %v2130 = vlaneseq
    %v2131 = vshrl.u32 %v2130, 7
    %v2132 = vsub.s32 0, %v2131
    %v2133 = vrot.slane %v2128, %v2132
    %v2139 = vunpack.c.l.b16 %v2123
    %v2140 = vunpack.c.l.b16 %v2124
    %v2141 = vunpack.c.l.b16 %v2125
    %v2142 = vunpack.c.l.b16 %v2126
    %v2143 = vpack.c.b16 %v2140, %v2139
    %v2144 = vpack.c.b16 %v2142, %v2141
    %2147 = vmatprep.subr.bf16.mxu0 0
    %2148 = vmatpush1.bf16.msra.mxu0 %v2143
    %2149 = vmatprep.subr.bf16.mxu0 0
    %2150 = vmatpush1.bf16.msra.mxu0 %v2144
    %2151 = vmatprep.subr.bf16.mxu0 0
    %2152 = vmatpush1.bf16.msra.mxu0 0
    %2153 = vmatprep.subr.bf16.mxu0 0
    %2154 = vmatpush1.bf16.msra.mxu0 0
    %2155 = vmatprep.subr.bf16.mxu0 0
    %2156 = vmatpush1.bf16.msra.mxu0 0
    %2157 = vmatprep.subr.bf16.mxu0 0
    %2158 = vmatpush1.bf16.msra.mxu0 0
    %2159 = vmatprep.subr.bf16.mxu0 0
    %2160 = vmatpush1.bf16.msra.mxu0 0
    %2161 = vmatprep.subr.bf16.mxu0 0
    %2162 = vmatpush1.bf16.msra.mxu0 0
    %2163 = vmatprep.subr.bf16.mxu0 0
    %2164 = vmatpush1.bf16.msra.mxu0 0
    %2165 = vmatprep.subr.bf16.mxu0 0
    %2166 = vmatpush1.bf16.msra.mxu0 0
    %2167 = vmatprep.subr.bf16.mxu0 0
    %2168 = vmatpush1.bf16.msra.mxu0 0
    %2169 = vmatprep.subr.bf16.mxu0 0
    %2170 = vmatpush1.bf16.msra.mxu0 0
    %2171 = vmatprep.subr.bf16.mxu0 0
    %2172 = vmatpush1.bf16.msra.mxu0 0
    %2173 = vmatprep.subr.bf16.mxu0 0
    %2174 = vmatpush1.bf16.msra.mxu0 0
    %2175 = vmatprep.subr.bf16.mxu0 0
    %2176 = vmatpush1.bf16.msra.mxu0 0
    %2177 = vmatprep.subr.bf16.mxu0 0
    %2178 = vmatpush1.bf16.msra.mxu0 0
    %2179 = vmatprep.mubr.bf16.mxu0 0
    %2180 = vmatmul.mubr.bf16.gmra.mrb[0].mxu0 %v1270
    %v2181 = vpop.f32.mrb[0].mxu0
    %v2182 = vadd.f32 %v2133, %v2181
    %v2183 = vpop.f32.mrb[0].mxu0
    %v2184 = vpop.f32.mrb[0].mxu0
    %v2185 = vpop.f32.mrb[0].mxu0
    %2186 = vdwg.mxu0
    %s2187 = scalar_lea.vmem %s10, 32
    %v2188 = vld [vmem:[%s2187] sm:$0xf]
    %v2189 = vld [vmem:[%s2187 + $0x4] sm:$0xf]
    %v2190 = vld [vmem:[%s2187 + $0x8] sm:$0xf]
    %v2191 = vld [vmem:[%s2187 + $0xc] sm:$0xf]
    %v2192 = vld [vmem:[%s2187 + $0x10] sm:$0xf]
    %v2193 = vld [vmem:[%s2187 + $0x14] sm:$0xf]
    %v2194 = vld [vmem:[%s2187 + $0x18] sm:$0xf]
    %v2195 = vld [vmem:[%s2187 + $0x1c] sm:$0xf]
    %v2196 = vpack.c.bf16 %v2074, %v2074
    %v2197 = vpack.c.bf16 %v2117, %v2117
    %v2202 = vunpack.c.l.b16 %v2188
    %v2203 = vunpack.c.l.b16 %v2189
    %v2204 = vunpack.c.l.b16 %v2190
    %v2205 = vunpack.c.l.b16 %v2191
    %v2206 = vpack.c.b16 %v2203, %v2202
    %v2207 = vpack.c.b16 %v2205, %v2204
    %v2211 = vsel %vm152, %v2196, 0
    %2213 = vmatprep.subr.bf16.mxu0 0
    %2214 = vmatpush1.bf16.msra.mxu0 %v2206
    %2215 = vmatprep.subr.bf16.mxu0 0
    %2216 = vmatpush1.bf16.msra.mxu0 %v2207
    %2217 = vmatprep.subr.bf16.mxu0 0
    %2218 = vmatpush1.bf16.msra.mxu0 0
    %2219 = vmatprep.subr.bf16.mxu0 0
    %2220 = vmatpush1.bf16.msra.mxu0 0
    %2221 = vmatprep.subr.bf16.mxu0 0
    %2222 = vmatpush1.bf16.msra.mxu0 0
    %2223 = vmatprep.subr.bf16.mxu0 0
    %2224 = vmatpush1.bf16.msra.mxu0 0
    %2225 = vmatprep.subr.bf16.mxu0 0
    %2226 = vmatpush1.bf16.msra.mxu0 0
    %2227 = vmatprep.subr.bf16.mxu0 0
    %2228 = vmatpush1.bf16.msra.mxu0 0
    %2229 = vmatprep.subr.bf16.mxu0 0
    %2230 = vmatpush1.bf16.msra.mxu0 0
    %2231 = vmatprep.subr.bf16.mxu0 0
    %2232 = vmatpush1.bf16.msra.mxu0 0
    %2233 = vmatprep.subr.bf16.mxu0 0
    %2234 = vmatpush1.bf16.msra.mxu0 0
    %2235 = vmatprep.subr.bf16.mxu0 0
    %2236 = vmatpush1.bf16.msra.mxu0 0
    %2237 = vmatprep.subr.bf16.mxu0 0
    %2238 = vmatpush1.bf16.msra.mxu0 0
    %2239 = vmatprep.subr.bf16.mxu0 0
    %2240 = vmatpush1.bf16.msra.mxu0 0
    %2241 = vmatprep.subr.bf16.mxu0 0
    %2242 = vmatpush1.bf16.msra.mxu0 0
    %2243 = vmatprep.subr.bf16.mxu0 0
    %2244 = vmatpush1.bf16.msra.mxu0 0
    %2245 = vmatprep.mubr.bf16.mxu0 0
    %2246 = vmatmul.mubr.bf16.gmra.mrb[0].mxu0 %v2211
    %v2247 = vpop.f32.mrb[0].mxu0
    %v2248 = vadd.f32 0.0, %v2247
    %v2249 = vpop.f32.mrb[0].mxu0
    %v2250 = vpop.f32.mrb[0].mxu0
    %v2251 = vpop.f32.mrb[0].mxu0
    %2252 = vdwg.mxu0
    %v2257 = vunpack.c.l.b16 %v2192
    %v2258 = vunpack.c.l.b16 %v2193
    %v2259 = vunpack.c.l.b16 %v2194
    %v2260 = vunpack.c.l.b16 %v2195
    %v2261 = vpack.c.b16 %v2258, %v2257
    %v2262 = vpack.c.b16 %v2260, %v2259
    %v2266 = vsel %vm152, %v2197, 0
    %2268 = vmatprep.subr.bf16.mxu0 0
    %2269 = vmatpush1.bf16.msra.mxu0 %v2261
    %2270 = vmatprep.subr.bf16.mxu0 0
    %2271 = vmatpush1.bf16.msra.mxu0 %v2262
    %2272 = vmatprep.subr.bf16.mxu0 0
    %2273 = vmatpush1.bf16.msra.mxu0 0
    %2274 = vmatprep.subr.bf16.mxu0 0
    %2275 = vmatpush1.bf16.msra.mxu0 0
    %2276 = vmatprep.subr.bf16.mxu0 0
    %2277 = vmatpush1.bf16.msra.mxu0 0
    %2278 = vmatprep.subr.bf16.mxu0 0
    %2279 = vmatpush1.bf16.msra.mxu0 0
    %2280 = vmatprep.subr.bf16.mxu0 0
    %2281 = vmatpush1.bf16.msra.mxu0 0
    %2282 = vmatprep.subr.bf16.mxu0 0
    %2283 = vmatpush1.bf16.msra.mxu0 0
    %2284 = vmatprep.subr.bf16.mxu0 0
    %2285 = vmatpush1.bf16.msra.mxu0 0
    %2286 = vmatprep.subr.bf16.mxu0 0
    %2287 = vmatpush1.bf16.msra.mxu0 0
    %2288 = vmatprep.subr.bf16.mxu0 0
    %2289 = vmatpush1.bf16.msra.mxu0 0
    %2290 = vmatprep.subr.bf16.mxu0 0
    %2291 = vmatpush1.bf16.msra.mxu0 0
    %2292 = vmatprep.subr.bf16.mxu0 0
    %2293 = vmatpush1.bf16.msra.mxu0 0
    %2294 = vmatprep.subr.bf16.mxu0 0
    %2295 = vmatpush1.bf16.msra.mxu0 0
    %2296 = vmatprep.subr.bf16.mxu0 0
    %2297 = vmatpush1.bf16.msra.mxu0 0
    %2298 = vmatprep.subr.bf16.mxu0 0
    %2299 = vmatpush1.bf16.msra.mxu0 0
    %2300 = vmatprep.mubr.bf16.mxu0 0
    %2301 = vmatmul.mubr.bf16.gmra.mrb[0].mxu0 %v2266
    %v2302 = vpop.f32.mrb[0].mxu0
    %v2303 = vadd.f32 0.0, %v2302
    %v2304 = vpop.f32.mrb[0].mxu0
    %v2305 = vpop.f32.mrb[0].mxu0
    %v2306 = vpop.f32.mrb[0].mxu0
    %2307 = vdwg.mxu0
    %v2308 = vsel %vm152, %v2248, 0.0
    %v2309 = vsel %vm152, %v2303, 0.0
    %v2310 = vadd.f32 %v2308, %v2309
    %v2311 = vadd.f32 %v2182, %v2310
    %2312 = vst.msk [vmem:[#allocation11] sm:$0xff] %vm152, %v2311
    // Predicated region
    $region70: #{tpu_custom_call.1} parent=1 // pred_check
      _
    $region71: #{tpu_custom_call.1} parent=1 // pred_check_branch
      %2314 = sbr.rel (0) target = $region73
    $region72: #{tpu_custom_call.1} parent=1 // pred_region
      %s2316 = ssub.s32 128, 128
      %2317 = vsyncadd [#allocation4], %s2316
      %s2319 = sshll.u32 [#allocation11], 4
      %s2320 = int_to_ptr.vmem [resolvable:$true] %s2319
      %2322 = dma.vmem_to_hbm [thread:$0]  %s2320, 128, %s12, [#allocation4]
    $region73: #{tpu_custom_call.1} parent=1 // pred_fallthru
      _
    // Predicated region
    $region74: #{tpu_custom_call.1} parent=1 // pred_check
      _
    $region75: #{tpu_custom_call.1} parent=1 // pred_check_branch
      %2324 = sbr.rel (0) target = $region77
    $region76: #{tpu_custom_call.1} parent=1 // pred_region
      %2325 = dma.done [#allocation4], 128
    $region77: #{tpu_custom_call.1} parent=1 // pred_fallthru
      _
    %2326 = vsyncpa [#allocation3], 1
    %2327 = vsyncpa [#allocation6], 1
    %2328 = vsyncpa [#allocation9], 1
    %2329 = vsyncpa [#allocation4], 1

</llo_original>
